<compile_context>
chip_gen: v6e
topology: v6e:2x2x1
jax: 0.10.0
libtpu: 0.0.40
codegen_flags: <defaults>
</compile_context>

<pallas_src>
import functools

import jax
import jax.numpy as jnp
from jax import lax
from jax.experimental import pallas as pl
from jax.experimental.pallas import tpu as pltpu


# ----------------------------------------------------------------------------
# Kernel body
# ----------------------------------------------------------------------------
def _mlp_kernel(n_hidden_layers,
                x_ref, w0_ref, b0_ref, wh_ref, bh_ref, wo_ref, bo_ref, o_ref):
    # x_ref:  (1, tile_n)            batch on lanes
    # w0_ref: (nodes, 1)             Linear(1, nodes).weight  [out, in]
    # b0_ref: (nodes, 1)
    # wh_ref: (layers, nodes, nodes) Linear(nodes, nodes).weight [out, in]
    # bh_ref: (layers, nodes, 1)
    # wo_ref: (nodes, 1)             Linear(nodes, 1).weight^T  (column)
    # bo_ref: (1, 1)
    # o_ref:  (1, tile_n)
    x = x_ref[...].astype(jnp.float32)                         # (1, tile_n)

    # Input layer (K=1): pure VPU broadcast / outer product, no MXU pass.
    h = jnp.maximum(w0_ref[...] * x + b0_ref[...], 0.0)        # (nodes, tile_n)

    # Hidden layers + ReLU on the MXU (M=K=nodes, N=tile_n).
    if n_hidden_layers <= 8:
        # Fully unroll small fixed layer counts (LLO scheduler visibility).
        for l in range(n_hidden_layers):
            h = jnp.maximum(
                jnp.dot(wh_ref[l], h, preferred_element_type=jnp.float32)
                + bh_ref[l], 0.0)
    else:
        # Many layers: visible loop bounds live ranges; unroll=2 recovers
        # most of the scheduling headroom without vreg spills.
        def body(l, h_):
            return jnp.maximum(
                jnp.dot(wh_ref[l], h_, preferred_element_type=jnp.float32)
                + bh_ref[l], 0.0)
        h = lax.fori_loop(0, n_hidden_layers, body, h, unroll=2)

    # Output layer (nodes -> 1): broadcast-multiply + sublane reduce (XLU),
    # plus the scalar bias. Keeps the MXU free.
    out = jnp.sum(wo_ref[...] * h, axis=0, keepdims=True) + bo_ref[...]
    o_ref[...] = out.astype(o_ref.dtype)                       # (1, tile_n)


# ----------------------------------------------------------------------------
# Tile-size selection (static, at trace time)
# ----------------------------------------------------------------------------
_MAX_TILE = 8192  # biggest lane tile; VMEM use is tiny at these model sizes


def _round_up(x, m):
    return ((x + m - 1) // m) * m


def _min_grid_steps():
    """v7x has 2 TensorCores per chip: keep >= 4 grid steps so the 'parallel'
    grid axis shards across both cores with some pipelining slack.  v5e/v6e
    are single-TC, so fewer (bigger) steps is strictly better there."""
    try:
        kind = jax.devices()[0].device_kind.lower()
        if "v7" in kind:
            return 4
    except Exception:
        pass
    return 1


def _choose_tile_n(n):
    min_steps = _min_grid_steps()
    tile = _round_up(max(1, pl.cdiv(n, min_steps)), 128)
    return max(128, min(_MAX_TILE, tile))


# ----------------------------------------------------------------------------
# Forward pass (single jit: layout plumbing + pallas_call fused together)
# ----------------------------------------------------------------------------
def _gen_phase_forward(widths, params):
    """widths: [N, 1] float -> phase: [N, 1] float32."""
    w0, b0, wh, bh, wo, bo = params
    n = widths.shape[0]
    layers = wh.shape[0]
    nodes = w0.shape[0]

    tile_n = _choose_tile_n(n)
    n_pad = _round_up(n, tile_n)

    # Lane-dense transform: batch on the lane axis, padded to a multiple of
    # tile_n (itself a multiple of 128).  Fused into this jit, so the pad /
    # transpose and the final slice / reshape ride with the kernel launch.
    x_row = jnp.zeros((1, n_pad), jnp.float32).at[0, :n].set(
        widths[:, 0].astype(jnp.float32))

    kernel = functools.partial(_mlp_kernel, layers)
    full = lambda shape: pl.BlockSpec(shape, lambda i: tuple(0 for _ in shape))

    weight_bytes = 4 * (w0.size + b0.size + wh.size + bh.size + wo.size + bo.size)
    cost = pl.CostEstimate(
        flops=2 * layers * nodes * nodes * n_pad + 6 * nodes * n_pad,
        transcendentals=0,
        bytes_accessed=8 * n_pad + weight_bytes,
    )

    out_row = pl.pallas_call(
        kernel,
        out_shape=jax.ShapeDtypeStruct((1, n_pad), jnp.float32),
        grid_spec=pltpu.PrefetchScalarGridSpec(
            num_scalar_prefetch=0,
            grid=(n_pad // tile_n,),
            in_specs=[
                pl.BlockSpec((1, tile_n), lambda i: (0, i)),   # widths (lane-dense)
                full((nodes, 1)),                              # w0  [out, in]
                full((nodes, 1)),                              # b0
                full((layers, nodes, nodes)),                  # wh  (stacked, [out, in])
                full((layers, nodes, 1)),                      # bh  (stacked)
                full((nodes, 1)),                              # wo (column)
                full((1, 1)),                                  # bo
            ],
            out_specs=pl.BlockSpec((1, tile_n), lambda i: (0, i)),
        ),
        compiler_params=pltpu.CompilerParams(
            dimension_semantics=("parallel",)),
        cost_estimate=cost,
    )(x_row, w0, b0, wh, bh, wo, bo)

    # Padded tail lanes carry bias-driven garbage; they are sliced off here.
    return out_row[0, :n].reshape(n, 1)


gen_phase_forward = jax.jit(_gen_phase_forward)


# ----------------------------------------------------------------------------
# Parameter init (matches nn.Linear uniform +-1/sqrt(fan_in)), kernel layout
# ----------------------------------------------------------------------------
def init_params(key, layers, nodes):
    # TODO(synk): gen_Phase.reset() loads a torch state_dict from disk; here
    # weights are initialized in-script instead (same layout: [out, in]).
    ks = jax.random.split(key, 6)

    def lin(k, fan_in, fan_out):
        bound = 1.0 / jnp.sqrt(jnp.float32(fan_in))
        kw, kb = jax.random.split(k)
        w = jax.random.uniform(kw, (fan_out, fan_in), jnp.float32, -bound, bound)
        b = jax.random.uniform(kb, (fan_out, 1), jnp.float32, -bound, bound)
        return w, b

    w0, b0 = lin(ks[0], 1, nodes)                          # (nodes, 1), (nodes, 1)
    wh_list, bh_list = [], []
    for l in range(layers):
        w, b = lin(jax.random.fold_in(ks[1], l), nodes, nodes)
        wh_list.append(w)
        bh_list.append(b)
    wh = jnp.stack(wh_list, axis=0)                        # (layers, nodes, nodes)
    bh = jnp.stack(bh_list, axis=0)                        # (layers, nodes, 1)
    wo_row, bo = lin(ks[2], nodes, 1)                      # (1, nodes), (1, 1)
    wo = wo_row.T                                          # (nodes, 1) column
    return (w0, b0, wh, bh, wo, bo)


def _ref_forward(widths, params):
    """Pure-JAX reference of the same MLP (for sanity checking)."""
    w0, b0, wh, bh, wo, bo = params
    h = jnp.maximum(widths @ w0.T + b0.T, 0.0)             # (N, nodes)
    for l in range(wh.shape[0]):
        h = jnp.maximum(h @ wh[l].T + bh[l].T, 0.0)
    return h @ wo + bo                                     # (N, 1)


if __name__ == "__main__":
    key = jax.random.PRNGKey(0)
    layers, nodes = 2, 32
    n = 2048  # batch of widths

    k_param, k_x = jax.random.split(key)
    params = init_params(k_param, layers, nodes)
    widths = jax.random.uniform(k_x, (n, 1), jnp.float32, 0.05, 0.3)

    phase = gen_phase_forward(widths, params)
    phase = jax.block_until_ready(phase)

    ref = _ref_forward(widths, params)
    assert phase.shape == (n, 1)
    assert jnp.allclose(phase, ref, atol=1e-4, rtol=1e-4)

    print("KERNEL_OK")
</pallas_src>

<mosaic_0001>
module attributes {stable_mosaic.version = 11 : i64} {
  func.func @_mlp_kernel(%arg0: i32, %arg1: memref<1x2048xf32, #tpu.memory_space<vmem>>, %arg2: memref<32x1xf32, #tpu.memory_space<vmem>>, %arg3: memref<32x1xf32, #tpu.memory_space<vmem>>, %arg4: memref<2x32x32xf32, #tpu.memory_space<vmem>>, %arg5: memref<2x32x1xf32, #tpu.memory_space<vmem>>, %arg6: memref<32x1xf32, #tpu.memory_space<vmem>>, %arg7: memref<1x1xf32, #tpu.memory_space<vmem>>, %arg8: memref<1x2048xf32, #tpu.memory_space<vmem>>) attributes {dimension_semantics = [#tpu.dimension_semantics<parallel>], iteration_bounds = array<i64: 1>, scalar_prefetch = 0 : i64, scratch_operands = 0 : i64, tpu.core_type = #tpu.core_type<tc>, window_params = [{transform_indices = @transform_0, window_bounds = array<i64: 1, 2048>}, {pipeline_mode = #tpu.pipeline_mode<synchronous>, transform_indices = @transform_1, window_bounds = array<i64: 32, 1>}, {pipeline_mode = #tpu.pipeline_mode<synchronous>, transform_indices = @transform_2, window_bounds = array<i64: 32, 1>}, {pipeline_mode = #tpu.pipeline_mode<synchronous>, transform_indices = @transform_3, window_bounds = array<i64: 2, 32, 32>}, {pipeline_mode = #tpu.pipeline_mode<synchronous>, transform_indices = @transform_4, window_bounds = array<i64: 2, 32, 1>}, {pipeline_mode = #tpu.pipeline_mode<synchronous>, transform_indices = @transform_5, window_bounds = array<i64: 32, 1>}, {pipeline_mode = #tpu.pipeline_mode<synchronous>, transform_indices = @transform_6, window_bounds = array<i64: 1, 1>}, {transform_indices = @transform_7, window_bounds = array<i64: 1, 2048>}]} {
    %c0 = arith.constant 0 : index
    %c0_0 = arith.constant 0 : index
    %0 = vector.load %arg1[%c0, %c0_0] : memref<1x2048xf32, #tpu.memory_space<vmem>>, vector<1x2048xf32>
    %c0_1 = arith.constant 0 : index
    %c0_2 = arith.constant 0 : index
    %1 = vector.load %arg2[%c0_1, %c0_2] : memref<32x1xf32, #tpu.memory_space<vmem>>, vector<32x1xf32>
    %2 = vector.broadcast %1 : vector<32x1xf32> to vector<32x2048xf32>
    %3 = vector.broadcast %0 : vector<1x2048xf32> to vector<32x2048xf32>
    %4 = arith.mulf %2, %3 : vector<32x2048xf32>
    %c0_3 = arith.constant 0 : index
    %c0_4 = arith.constant 0 : index
    %5 = vector.load %arg3[%c0_3, %c0_4] : memref<32x1xf32, #tpu.memory_space<vmem>>, vector<32x1xf32>
    %6 = vector.broadcast %5 : vector<32x1xf32> to vector<32x2048xf32>
    %7 = arith.addf %4, %6 : vector<32x2048xf32>
    %cst = arith.constant 0.000000e+00 : f32
    %8 = vector.broadcast %cst : f32 to vector<32x2048xf32>
    %9 = arith.maximumf %7, %8 : vector<32x2048xf32>
    %c0_5 = arith.constant 0 : index
    %c0_6 = arith.constant 0 : index
    %c0_7 = arith.constant 0 : index
    %10 = vector.load %arg4[%c0_5, %c0_6, %c0_7] : memref<2x32x32xf32, #tpu.memory_space<vmem>>, vector<1x32x32xf32>
    %11 = vector.shape_cast %10 : vector<1x32x32xf32> to vector<32x32xf32>
    %cst_8 = arith.constant dense<0.000000e+00> : vector<32x2048xf32>
    %12 = tpu.matmul %11, %9, %cst_8 {dimension_numbers = #tpu.dot_dimension_numbers<[1], [0], [0], [1], [0, 0, 1, 1], [], []>} : vector<32x32xf32>, vector<32x2048xf32>, vector<32x2048xf32> -> vector<32x2048xf32>
    %c0_9 = arith.constant 0 : index
    %c0_10 = arith.constant 0 : index
    %c0_11 = arith.constant 0 : index
    %13 = vector.load %arg5[%c0_9, %c0_10, %c0_11] : memref<2x32x1xf32, #tpu.memory_space<vmem>>, vector<1x32x1xf32>
    %14 = vector.shape_cast %13 : vector<1x32x1xf32> to vector<32x1xf32>
    %15 = vector.broadcast %14 : vector<32x1xf32> to vector<32x2048xf32>
    %16 = arith.addf %12, %15 : vector<32x2048xf32>
    %cst_12 = arith.constant 0.000000e+00 : f32
    %17 = vector.broadcast %cst_12 : f32 to vector<32x2048xf32>
    %18 = arith.maximumf %16, %17 : vector<32x2048xf32>
    %c1 = arith.constant 1 : index
    %c0_13 = arith.constant 0 : index
    %c0_14 = arith.constant 0 : index
    %19 = vector.load %arg4[%c1, %c0_13, %c0_14] : memref<2x32x32xf32, #tpu.memory_space<vmem>>, vector<1x32x32xf32>
    %20 = vector.shape_cast %19 : vector<1x32x32xf32> to vector<32x32xf32>
    %cst_15 = arith.constant dense<0.000000e+00> : vector<32x2048xf32>
    %21 = tpu.matmul %20, %18, %cst_15 {dimension_numbers = #tpu.dot_dimension_numbers<[1], [0], [0], [1], [0, 0, 1, 1], [], []>} : vector<32x32xf32>, vector<32x2048xf32>, vector<32x2048xf32> -> vector<32x2048xf32>
    %c1_16 = arith.constant 1 : index
    %c0_17 = arith.constant 0 : index
    %c0_18 = arith.constant 0 : index
    %22 = vector.load %arg5[%c1_16, %c0_17, %c0_18] : memref<2x32x1xf32, #tpu.memory_space<vmem>>, vector<1x32x1xf32>
    %23 = vector.shape_cast %22 : vector<1x32x1xf32> to vector<32x1xf32>
    %24 = vector.broadcast %23 : vector<32x1xf32> to vector<32x2048xf32>
    %25 = arith.addf %21, %24 : vector<32x2048xf32>
    %cst_19 = arith.constant 0.000000e+00 : f32
    %26 = vector.broadcast %cst_19 : f32 to vector<32x2048xf32>
    %27 = arith.maximumf %25, %26 : vector<32x2048xf32>
    %c0_20 = arith.constant 0 : index
    %c0_21 = arith.constant 0 : index
    %28 = vector.load %arg6[%c0_20, %c0_21] : memref<32x1xf32, #tpu.memory_space<vmem>>, vector<32x1xf32>
    %29 = vector.broadcast %28 : vector<32x1xf32> to vector<32x2048xf32>
    %30 = arith.mulf %29, %27 : vector<32x2048xf32>
    %cst_22 = arith.constant dense<0.000000e+00> : vector<2048xf32>
    %31 = vector.multi_reduction <add>, %30, %cst_22 [0] : vector<32x2048xf32> to vector<2048xf32>
    %32 = vector.shape_cast %31 : vector<2048xf32> to vector<1x2048xf32>
    %c0_23 = arith.constant 0 : index
    %c0_24 = arith.constant 0 : index
    %33 = vector.load %arg7[%c0_23, %c0_24] : memref<1x1xf32, #tpu.memory_space<vmem>>, vector<1x1xf32>
    %34 = vector.broadcast %33 : vector<1x1xf32> to vector<1x2048xf32>
    %35 = arith.addf %32, %34 : vector<1x2048xf32>
    %c0_25 = arith.constant 0 : index
    %c0_26 = arith.constant 0 : index
    %36 = vector.load %arg8[%c0_25, %c0_26] : memref<1x2048xf32, #tpu.memory_space<vmem>>, vector<1x2048xf32>
    tpu.vector_store %arg8[%c0_25, %c0_26], %35 {strides = array<i32>} : memref<1x2048xf32, #tpu.memory_space<vmem>>, vector<1x2048xf32>,
    return
  }
  func.func @transform_0(%arg0: i32) -> (i32, i32) {
    %c0_i32 = arith.constant 0 : i32
    %c0_i32_0 = arith.constant 0 : i32
    return %c0_i32, %arg0 : i32, i32
  }
  func.func @transform_1(%arg0: i32) -> (i32, i32) {
    %c0_i32 = arith.constant 0 : i32
    %c0_i32_0 = arith.constant 0 : i32
    %c0_i32_1 = arith.constant 0 : i32
    return %c0_i32, %c0_i32_0 : i32, i32
  }
  func.func @transform_2(%arg0: i32) -> (i32, i32) {
    %c0_i32 = arith.constant 0 : i32
    %c0_i32_0 = arith.constant 0 : i32
    %c0_i32_1 = arith.constant 0 : i32
    return %c0_i32, %c0_i32_0 : i32, i32
  }
  func.func @transform_3(%arg0: i32) -> (i32, i32, i32) {
    %c0_i32 = arith.constant 0 : i32
    %c0_i32_0 = arith.constant 0 : i32
    %c0_i32_1 = arith.constant 0 : i32
    %c0_i32_2 = arith.constant 0 : i32
    return %c0_i32, %c0_i32_0, %c0_i32_1 : i32, i32, i32
  }
  func.func @transform_4(%arg0: i32) -> (i32, i32, i32) {
    %c0_i32 = arith.constant 0 : i32
    %c0_i32_0 = arith.constant 0 : i32
    %c0_i32_1 = arith.constant 0 : i32
    %c0_i32_2 = arith.constant 0 : i32
    return %c0_i32, %c0_i32_0, %c0_i32_1 : i32, i32, i32
  }
  func.func @transform_5(%arg0: i32) -> (i32, i32) {
    %c0_i32 = arith.constant 0 : i32
    %c0_i32_0 = arith.constant 0 : i32
    %c0_i32_1 = arith.constant 0 : i32
    return %c0_i32, %c0_i32_0 : i32, i32
  }
  func.func @transform_6(%arg0: i32) -> (i32, i32) {
    %c0_i32 = arith.constant 0 : i32
    %c0_i32_0 = arith.constant 0 : i32
    %c0_i32_1 = arith.constant 0 : i32
    return %c0_i32, %c0_i32_0 : i32, i32
  }
  func.func @transform_7(%arg0: i32) -> (i32, i32) {
    %c0_i32 = arith.constant 0 : i32
    %c0_i32_0 = arith.constant 0 : i32
    return %c0_i32, %arg0 : i32, i32
  }
}

</mosaic_0001>

<llo_original>
// kernel: _gen_phase_forward.1
$region0: #{_gen_phase_forward.1}
  #allocation0 [shape = 'u32[]', space=smem, size = 0x4, offset = 0x4, fixed_abs, tag = 'smem constant byte address 0x4 - core index']
  #allocation1 [shape = 'u32[144,128]{1,0:T(1,128)}', space=vmem, size = 0x12000, scoped, tag = 'internal scratch']
  #allocation2 [shape = 'f32[1,1]{1,0:T(1,128)S(1)}', space=vmem, size = 0x200, scoped, tag = 'scoped memory for _gen_phase_forward.1']
  %s0 = inlined_call_operand.vmem [shape: f32[1,2048], index: 0, kind: input, shape index: {}]
  %s1 = inlined_call_operand.vmem [shape: f32[32,1], index: 1, kind: input, shape index: {}]
  %s2 = inlined_call_operand.vmem [shape: f32[32,1], index: 2, kind: input, shape index: {}]
  %s3 = inlined_call_operand.vmem [shape: f32[2,32,32], index: 3, kind: input, shape index: {}]
  %s4 = inlined_call_operand.vmem [shape: f32[2,32,1], index: 4, kind: input, shape index: {}]
  %s5 = inlined_call_operand.vmem [shape: f32[32,1], index: 5, kind: input, shape index: {}]
  %s6 = inlined_call_operand.<no memory space> [shape: f32[1,1], index: 6, kind: input, shape index: {}]
  %s7 = inlined_call_operand.hbm [shape: f32[1,2048], index: 7, kind: output, shape index: {}]
  %s8 = sld [smem:[#allocation0]]
  $region38: #{_gen_phase_forward.1} parent=0
    _
  %s10 = ssub.s32 1, %s8
  %s11 = scalar_select 0, %s10, %s8
  %v12 = vstv %s6
  %13 = vst [vmem:[#allocation2] sm:$0x1] %v12
  $region1: #{_gen_phase_forward.1} parent=0
    #allocation3 [shape = 'u8[8192]{0}', space=vmem, size = 0x2000, scoped, tag = 'output window, operand 0, single buffered']
    #allocation4 [shape = 's32[1]{0}', space=sflag, size = 0x4, scoped, tag = 'scoped memory for _gen_phase_forward.1']
    %14 = vsyncpa [#allocation4], 0
    // Predicated region
    $region2: #{_gen_phase_forward.1} parent=1 // pred_check
      _
    $region3: #{_gen_phase_forward.1} parent=1 // pred_check_branch
      %16 = sbr.rel (0) target = $region5
    $region4: #{_gen_phase_forward.1} parent=1 // pred_region
      _
    $region5: #{_gen_phase_forward.1} parent=1 // pred_fallthru
      _
    // Predicated region
    $region6: #{_gen_phase_forward.1} parent=1 // pred_check
      _
    $region7: #{_gen_phase_forward.1} parent=1 // pred_check_branch
      %18 = sbr.rel (0) target = $region9
    $region8: #{_gen_phase_forward.1} parent=1 // pred_region
      _
    $region9: #{_gen_phase_forward.1} parent=1 // pred_fallthru
      _
    // Predicated region
    $region10: #{_gen_phase_forward.1} parent=1 // pred_check
      _
    $region11: #{_gen_phase_forward.1} parent=1 // pred_check_branch
      %20 = sbr.rel (0) target = $region13
    $region12: #{_gen_phase_forward.1} parent=1 // pred_region
      _
    $region13: #{_gen_phase_forward.1} parent=1 // pred_fallthru
      _
    // Predicated region
    $region14: #{_gen_phase_forward.1} parent=1 // pred_check
      _
    $region15: #{_gen_phase_forward.1} parent=1 // pred_check_branch
      %22 = sbr.rel (0) target = $region17
    $region16: #{_gen_phase_forward.1} parent=1 // pred_region
      _
    $region17: #{_gen_phase_forward.1} parent=1 // pred_fallthru
      _
    // Predicated region
    $region18: #{_gen_phase_forward.1} parent=1 // pred_check
      _
    $region19: #{_gen_phase_forward.1} parent=1 // pred_check_branch
      %24 = sbr.rel (0) target = $region21
    $region20: #{_gen_phase_forward.1} parent=1 // pred_region
      _
    $region21: #{_gen_phase_forward.1} parent=1 // pred_fallthru
      _
    // Predicated region
    $region22: #{_gen_phase_forward.1} parent=1 // pred_check
      _
    $region23: #{_gen_phase_forward.1} parent=1 // pred_check_branch
      %26 = sbr.rel (0) target = $region25
    $region24: #{_gen_phase_forward.1} parent=1 // pred_region
      _
    $region25: #{_gen_phase_forward.1} parent=1 // pred_fallthru
      _
    // Predicated region
    $region26: #{_gen_phase_forward.1} parent=1 // pred_check
      _
    $region27: #{_gen_phase_forward.1} parent=1 // pred_check_branch
      %28 = sbr.rel (0) target = $region29
    $region28: #{_gen_phase_forward.1} parent=1 // pred_region
      _
    $region29: #{_gen_phase_forward.1} parent=1 // pred_fallthru
      _
    %v29 = vld [vmem:[%s0] sm:$0xff]
    %v30 = vld [vmem:[%s0 + $0x8] sm:$0xff]
    %v31 = vld [vmem:[%s1] sm:$0xff]
    %v32 = vld [vmem:[%s1 + $0x8] sm:$0xff]
    %v33 = vld [vmem:[%s1 + $0x10] sm:$0xff]
    %v34 = vld [vmem:[%s1 + $0x18] sm:$0xff]
    %36 = vset.pattern.permute.xlu0 0
    %37 = vperm.xlu0 %36, %v31
    %v38 = vpop.permute.xlu0 %37
    %41 = vset.pattern.permute.xlu0 0
    %42 = vperm.xlu0 %41, %v32
    %v43 = vpop.permute.xlu0 %42
    %46 = vset.pattern.permute.xlu0 0
    %47 = vperm.xlu0 %46, %v33
    %v48 = vpop.permute.xlu0 %47
    %51 = vset.pattern.permute.xlu0 0
    %52 = vperm.xlu0 %51, %v34
    %v53 = vpop.permute.xlu0 %52
    %v57 = vlaneseq
    %v58 = vshrl.u32 %v57, 7
    %v59 = vsub.s32 0, %v58
    %v60 = vrot.slane %v29, %v59
    %v61 = vlaneseq
    %v62 = vshrl.u32 %v61, 7
    %v63 = vsub.s32 1, %v62
    %v64 = vrot.slane %v29, %v63
    %v65 = vlaneseq
    %v66 = vshrl.u32 %v65, 7
    %v67 = vsub.s32 2, %v66
    %v68 = vrot.slane %v29, %v67
    %v69 = vlaneseq
    %v70 = vshrl.u32 %v69, 7
    %v71 = vsub.s32 3, %v70
    %v72 = vrot.slane %v29, %v71
    %v73 = vlaneseq
    %v74 = vshrl.u32 %v73, 7
    %v75 = vsub.s32 4, %v74
    %v76 = vrot.slane %v29, %v75
    %v77 = vlaneseq
    %v78 = vshrl.u32 %v77, 7
    %v79 = vsub.s32 5, %v78
    %v80 = vrot.slane %v29, %v79
    %v81 = vlaneseq
    %v82 = vshrl.u32 %v81, 7
    %v83 = vsub.s32 6, %v82
    %v84 = vrot.slane %v29, %v83
    %v85 = vlaneseq
    %v86 = vshrl.u32 %v85, 7
    %v87 = vsub.s32 7, %v86
    %v88 = vrot.slane %v29, %v87
    %v89 = vlaneseq
    %v90 = vshrl.u32 %v89, 7
    %v91 = vsub.s32 0, %v90
    %v92 = vrot.slane %v30, %v91
    %v93 = vlaneseq
    %v94 = vshrl.u32 %v93, 7
    %v95 = vsub.s32 1, %v94
    %v96 = vrot.slane %v30, %v95
    %v97 = vlaneseq
    %v98 = vshrl.u32 %v97, 7
    %v99 = vsub.s32 2, %v98
    %v100 = vrot.slane %v30, %v99
    %v101 = vlaneseq
    %v102 = vshrl.u32 %v101, 7
    %v103 = vsub.s32 3, %v102
    %v104 = vrot.slane %v30, %v103
    %v105 = vlaneseq
    %v106 = vshrl.u32 %v105, 7
    %v107 = vsub.s32 4, %v106
    %v108 = vrot.slane %v30, %v107
    %v109 = vlaneseq
    %v110 = vshrl.u32 %v109, 7
    %v111 = vsub.s32 5, %v110
    %v112 = vrot.slane %v30, %v111
    %v113 = vlaneseq
    %v114 = vshrl.u32 %v113, 7
    %v115 = vsub.s32 6, %v114
    %v116 = vrot.slane %v30, %v115
    %v117 = vlaneseq
    %v118 = vshrl.u32 %v117, 7
    %v119 = vsub.s32 7, %v118
    %v120 = vrot.slane %v30, %v119
    %v137 = vmul.f32 %v38, %v60
    %v138 = vmul.f32 %v38, %v64
    %v139 = vmul.f32 %v38, %v68
    %v140 = vmul.f32 %v38, %v72
    %v141 = vmul.f32 %v38, %v76
    %v142 = vmul.f32 %v38, %v80
    %v143 = vmul.f32 %v38, %v84
    %v144 = vmul.f32 %v38, %v88
    %v145 = vmul.f32 %v38, %v92
    %v146 = vmul.f32 %v38, %v96
    %v147 = vmul.f32 %v38, %v100
    %v148 = vmul.f32 %v38, %v104
    %v149 = vmul.f32 %v38, %v108
    %v150 = vmul.f32 %v38, %v112
    %v151 = vmul.f32 %v38, %v116
    %v152 = vmul.f32 %v38, %v120
    %v153 = vmul.f32 %v43, %v60
    %v154 = vmul.f32 %v43, %v64
    %v155 = vmul.f32 %v43, %v68
    %v156 = vmul.f32 %v43, %v72
    %v157 = vmul.f32 %v43, %v76
    %v158 = vmul.f32 %v43, %v80
    %v159 = vmul.f32 %v43, %v84
    %v160 = vmul.f32 %v43, %v88
    %v161 = vmul.f32 %v43, %v92
    %v162 = vmul.f32 %v43, %v96
    %v163 = vmul.f32 %v43, %v100
    %v164 = vmul.f32 %v43, %v104
    %v165 = vmul.f32 %v43, %v108
    %v166 = vmul.f32 %v43, %v112
    %v167 = vmul.f32 %v43, %v116
    %v168 = vmul.f32 %v43, %v120
    %v169 = vmul.f32 %v48, %v60
    %v170 = vmul.f32 %v48, %v64
    %v171 = vmul.f32 %v48, %v68
    %v172 = vmul.f32 %v48, %v72
    %v173 = vmul.f32 %v48, %v76
    %v174 = vmul.f32 %v48, %v80
    %v175 = vmul.f32 %v48, %v84
    %v176 = vmul.f32 %v48, %v88
    %v177 = vmul.f32 %v48, %v92
    %v178 = vmul.f32 %v48, %v96
    %v179 = vmul.f32 %v48, %v100
    %v180 = vmul.f32 %v48, %v104
    %v181 = vmul.f32 %v48, %v108
    %v182 = vmul.f32 %v48, %v112
    %v183 = vmul.f32 %v48, %v116
    %v184 = vmul.f32 %v48, %v120
    %v185 = vmul.f32 %v53, %v60
    %v186 = vmul.f32 %v53, %v64
    %v187 = vmul.f32 %v53, %v68
    %v188 = vmul.f32 %v53, %v72
    %v189 = vmul.f32 %v53, %v76
    %v190 = vmul.f32 %v53, %v80
    %v191 = vmul.f32 %v53, %v84
    %v192 = vmul.f32 %v53, %v88
    %v193 = vmul.f32 %v53, %v92
    %v194 = vmul.f32 %v53, %v96
    %v195 = vmul.f32 %v53, %v100
    %v196 = vmul.f32 %v53, %v104
    %v197 = vmul.f32 %v53, %v108
    %v198 = vmul.f32 %v53, %v112
    %v199 = vmul.f32 %v53, %v116
    %v200 = vmul.f32 %v53, %v120
    %v201 = vld [vmem:[%s2] sm:$0xff]
    %v202 = vld [vmem:[%s2 + $0x8] sm:$0xff]
    %v203 = vld [vmem:[%s2 + $0x10] sm:$0xff]
    %v204 = vld [vmem:[%s2 + $0x18] sm:$0xff]
    %206 = vset.pattern.permute.xlu0 0
    %207 = vperm.xlu0 %206, %v201
    %v208 = vpop.permute.xlu0 %207
    %211 = vset.pattern.permute.xlu0 0
    %212 = vperm.xlu0 %211, %v202
    %v213 = vpop.permute.xlu0 %212
    %216 = vset.pattern.permute.xlu0 0
    %217 = vperm.xlu0 %216, %v203
    %v218 = vpop.permute.xlu0 %217
    %221 = vset.pattern.permute.xlu0 0
    %222 = vperm.xlu0 %221, %v204
    %v223 = vpop.permute.xlu0 %222
    %v225 = vadd.f32 %v137, %v208
    %v226 = vadd.f32 %v138, %v208
    %v227 = vadd.f32 %v139, %v208
    %v228 = vadd.f32 %v140, %v208
    %v229 = vadd.f32 %v141, %v208
    %v230 = vadd.f32 %v142, %v208
    %v231 = vadd.f32 %v143, %v208
    %v232 = vadd.f32 %v144, %v208
    %v233 = vadd.f32 %v145, %v208
    %v234 = vadd.f32 %v146, %v208
    %v235 = vadd.f32 %v147, %v208
    %v236 = vadd.f32 %v148, %v208
    %v237 = vadd.f32 %v149, %v208
    %v238 = vadd.f32 %v150, %v208
    %v239 = vadd.f32 %v151, %v208
    %v240 = vadd.f32 %v152, %v208
    %v241 = vadd.f32 %v153, %v213
    %v242 = vadd.f32 %v154, %v213
    %v243 = vadd.f32 %v155, %v213
    %v244 = vadd.f32 %v156, %v213
    %v245 = vadd.f32 %v157, %v213
    %v246 = vadd.f32 %v158, %v213
    %v247 = vadd.f32 %v159, %v213
    %v248 = vadd.f32 %v160, %v213
    %v249 = vadd.f32 %v161, %v213
    %v250 = vadd.f32 %v162, %v213
    %v251 = vadd.f32 %v163, %v213
    %v252 = vadd.f32 %v164, %v213
    %v253 = vadd.f32 %v165, %v213
    %v254 = vadd.f32 %v166, %v213
    %v255 = vadd.f32 %v167, %v213
    %v256 = vadd.f32 %v168, %v213
    %v257 = vadd.f32 %v169, %v218
    %v258 = vadd.f32 %v170, %v218
    %v259 = vadd.f32 %v171, %v218
    %v260 = vadd.f32 %v172, %v218
    %v261 = vadd.f32 %v173, %v218
    %v262 = vadd.f32 %v174, %v218
    %v263 = vadd.f32 %v175, %v218
    %v264 = vadd.f32 %v176, %v218
    %v265 = vadd.f32 %v177, %v218
    %v266 = vadd.f32 %v178, %v218
    %v267 = vadd.f32 %v179, %v218
    %v268 = vadd.f32 %v180, %v218
    %v269 = vadd.f32 %v181, %v218
    %v270 = vadd.f32 %v182, %v218
    %v271 = vadd.f32 %v183, %v218
    %v272 = vadd.f32 %v184, %v218
    %v273 = vadd.f32 %v185, %v223
    %v274 = vadd.f32 %v186, %v223
    %v275 = vadd.f32 %v187, %v223
    %v276 = vadd.f32 %v188, %v223
    %v277 = vadd.f32 %v189, %v223
    %v278 = vadd.f32 %v190, %v223
    %v279 = vadd.f32 %v191, %v223
    %v280 = vadd.f32 %v192, %v223
    %v281 = vadd.f32 %v193, %v223
    %v282 = vadd.f32 %v194, %v223
    %v283 = vadd.f32 %v195, %v223
    %v284 = vadd.f32 %v196, %v223
    %v285 = vadd.f32 %v197, %v223
    %v286 = vadd.f32 %v198, %v223
    %v287 = vadd.f32 %v199, %v223
    %v288 = vadd.f32 %v200, %v223
    %v289 = vmax.f32 %v225, 0.0
    %v290 = vmax.f32 %v226, 0.0
    %v291 = vmax.f32 %v227, 0.0
    %v292 = vmax.f32 %v228, 0.0
    %v293 = vmax.f32 %v229, 0.0
    %v294 = vmax.f32 %v230, 0.0
    %v295 = vmax.f32 %v231, 0.0
    %v296 = vmax.f32 %v232, 0.0
    %v297 = vmax.f32 %v233, 0.0
    %v298 = vmax.f32 %v234, 0.0
    %v299 = vmax.f32 %v235, 0.0
    %v300 = vmax.f32 %v236, 0.0
    %v301 = vmax.f32 %v237, 0.0
    %v302 = vmax.f32 %v238, 0.0
    %v303 = vmax.f32 %v239, 0.0
    %v304 = vmax.f32 %v240, 0.0
    %v305 = vmax.f32 %v241, 0.0
    %v306 = vmax.f32 %v242, 0.0
    %v307 = vmax.f32 %v243, 0.0
    %v308 = vmax.f32 %v244, 0.0
    %v309 = vmax.f32 %v245, 0.0
    %v310 = vmax.f32 %v246, 0.0
    %v311 = vmax.f32 %v247, 0.0
    %v312 = vmax.f32 %v248, 0.0
    %v313 = vmax.f32 %v249, 0.0
    %v314 = vmax.f32 %v250, 0.0
    %v315 = vmax.f32 %v251, 0.0
    %v316 = vmax.f32 %v252, 0.0
    %v317 = vmax.f32 %v253, 0.0
    %v318 = vmax.f32 %v254, 0.0
    %v319 = vmax.f32 %v255, 0.0
    %v320 = vmax.f32 %v256, 0.0
    %v321 = vmax.f32 %v257, 0.0
    %v322 = vmax.f32 %v258, 0.0
    %v323 = vmax.f32 %v259, 0.0
    %v324 = vmax.f32 %v260, 0.0
    %v325 = vmax.f32 %v261, 0.0
    %v326 = vmax.f32 %v262, 0.0
    %v327 = vmax.f32 %v263, 0.0
    %v328 = vmax.f32 %v264, 0.0
    %v329 = vmax.f32 %v265, 0.0
    %v330 = vmax.f32 %v266, 0.0
    %v331 = vmax.f32 %v267, 0.0
    %v332 = vmax.f32 %v268, 0.0
    %v333 = vmax.f32 %v269, 0.0
    %v334 = vmax.f32 %v270, 0.0
    %v335 = vmax.f32 %v271, 0.0
    %v336 = vmax.f32 %v272, 0.0
    %v337 = vmax.f32 %v273, 0.0
    %v338 = vmax.f32 %v274, 0.0
    %v339 = vmax.f32 %v275, 0.0
    %v340 = vmax.f32 %v276, 0.0
    %v341 = vmax.f32 %v277, 0.0
    %v342 = vmax.f32 %v278, 0.0
    %v343 = vmax.f32 %v279, 0.0
    %v344 = vmax.f32 %v280, 0.0
    %v345 = vmax.f32 %v281, 0.0
    %v346 = vmax.f32 %v282, 0.0
    %v347 = vmax.f32 %v283, 0.0
    %v348 = vmax.f32 %v284, 0.0
    %v349 = vmax.f32 %v285, 0.0
    %v350 = vmax.f32 %v286, 0.0
    %v351 = vmax.f32 %v287, 0.0
    %v352 = vmax.f32 %v288, 0.0
    %v353 = vld [vmem:[%s3] sm:$0xff]
    %v354 = vld [vmem:[%s3 + $0x8] sm:$0xff]
    %v355 = vld [vmem:[%s3 + $0x10] sm:$0xff]
    %v356 = vld [vmem:[%s3 + $0x18] sm:$0xff]
    %v357 = vld [vmem:[%s4] sm:$0xff]
    %v358 = vld [vmem:[%s4 + $0x8] sm:$0xff]
    %v359 = vld [vmem:[%s4 + $0x10] sm:$0xff]
    %v360 = vld [vmem:[%s4 + $0x18] sm:$0xff]
    %362 = vset.pattern.permute.xlu0 0
    %363 = vperm.xlu0 %362, %v357
    %v364 = vpop.permute.xlu0 %363
    %367 = vset.pattern.permute.xlu0 0
    %368 = vperm.xlu0 %367, %v358
    %v369 = vpop.permute.xlu0 %368
    %372 = vset.pattern.permute.xlu0 0
    %373 = vperm.xlu0 %372, %v359
    %v374 = vpop.permute.xlu0 %373
    %377 = vset.pattern.permute.xlu0 0
    %378 = vperm.xlu0 %377, %v360
    %v379 = vpop.permute.xlu0 %378
    %vm381 = vcmask 261120
    %v383 = vsel %vm381, %v353, 0
    %v386 = vsel %vm381, %v354, 0
    %v389 = vsel %vm381, %v355, 0
    %v392 = vsel %vm381, %v356, 0
    %394 = vmatprep.subr.mxu0 0.0
    %395 = vmatpush1.msra.mxu0 0.0
    %396 = vmatprep.subr.mxu0 0.0
    %397 = vmatpush1.msra.mxu0 0.0
    %398 = vmatprep.subr.mxu0 0.0
    %399 = vmatpush1.msra.mxu0 0.0
    %400 = vmatprep.subr.mxu0 0.0
    %401 = vmatpush1.msra.mxu0 0.0
    %402 = vmatprep.subr.mxu0 0.0
    %403 = vmatpush1.msra.mxu0 0.0
    %404 = vmatprep.subr.mxu0 0.0
    %405 = vmatpush1.msra.mxu0 0.0
    %406 = vmatprep.subr.mxu0 0.0
    %407 = vmatpush1.msra.mxu0 0.0
    %408 = vmatprep.subr.mxu0 0.0
    %409 = vmatpush1.msra.mxu0 0.0
    %410 = vmatprep.subr.mxu0 0.0
    %411 = vmatpush1.msra.mxu0 0.0
    %412 = vmatprep.subr.mxu0 0.0
    %413 = vmatpush1.msra.mxu0 0.0
    %414 = vmatprep.subr.mxu0 0.0
    %415 = vmatpush1.msra.mxu0 0.0
    %416 = vmatprep.subr.mxu0 0.0
    %417 = vmatpush1.msra.mxu0 0.0
    %418 = vmatprep.subr.mxu0 %v338
    %419 = vmatpush1.msra.mxu0 %v337
    %420 = vmatprep.subr.mxu0 %v322
    %421 = vmatpush1.msra.mxu0 %v321
    %422 = vmatprep.subr.mxu0 %v306
    %423 = vmatpush1.msra.mxu0 %v305
    %424 = vmatprep.subr.mxu0 %v290
    %425 = vmatpush1.msra.mxu0 %v289
    %426 = vmatprep.subr.mxu0 0.0
    %427 = vmatpush2.msra.mxu0 0.0
    %428 = vmatprep.subr.mxu0 0.0
    %429 = vmatpush2.msra.mxu0 0.0
    %430 = vmatprep.subr.mxu0 0.0
    %431 = vmatpush2.msra.mxu0 0.0
    %432 = vmatprep.subr.mxu0 0.0
    %433 = vmatpush2.msra.mxu0 0.0
    %434 = vmatprep.subr.mxu0 0.0
    %435 = vmatpush2.msra.mxu0 0.0
    %436 = vmatprep.subr.mxu0 0.0
    %437 = vmatpush2.msra.mxu0 0.0
    %438 = vmatprep.subr.mxu0 0.0
    %439 = vmatpush2.msra.mxu0 0.0
    %440 = vmatprep.subr.mxu0 0.0
    %441 = vmatpush2.msra.mxu0 0.0
    %442 = vmatprep.subr.mxu0 0.0
    %443 = vmatpush2.msra.mxu0 0.0
    %444 = vmatprep.subr.mxu0 0.0
    %445 = vmatpush2.msra.mxu0 0.0
    %446 = vmatprep.subr.mxu0 0.0
    %447 = vmatpush2.msra.mxu0 0.0
    %448 = vmatprep.subr.mxu0 0.0
    %449 = vmatpush2.msra.mxu0 0.0
    %450 = vmatprep.subr.mxu0 0.0
    %451 = vmatpush2.msra.mxu0 0.0
    %452 = vmatprep.subr.mxu0 0.0
    %453 = vmatpush2.msra.mxu0 0.0
    %454 = vmatprep.subr.mxu0 0.0
    %455 = vmatpush2.msra.mxu0 0.0
    %456 = vmatprep.subr.mxu0 0.0
    %457 = vmatpush2.msra.mxu0 0.0
    %458 = vmatprep.mubr.f32.mxu0 0.0
    %459 = vmatmul.mubr.f32.gmra.mxu0 %v383
    %v460 = vpop.f32.mrf.mxu0
    %v461 = vadd.f32 %v364, %v460
    %v462 = vpop.f32.mrf.mxu0
    %v463 = vadd.f32 %v364, %v462
    %464 = vmatprep.mubr.f32.mxu0 0.0
    %465 = vmatmul.mubr.f32.gmra.mxu0 %v386
    %v466 = vpop.f32.mrf.mxu0
    %v467 = vadd.f32 %v369, %v466
    %v468 = vpop.f32.mrf.mxu0
    %v469 = vadd.f32 %v369, %v468
    %470 = vmatprep.mubr.f32.mxu0 0.0
    %471 = vmatmul.mubr.f32.gmra.mxu0 %v389
    %v472 = vpop.f32.mrf.mxu0
    %v473 = vadd.f32 %v374, %v472
    %v474 = vpop.f32.mrf.mxu0
    %v475 = vadd.f32 %v374, %v474
    %476 = vmatprep.mubr.f32.mxu0 0.0
    %477 = vmatmul.mubr.f32.gmra.mxu0 %v392
    %v478 = vpop.f32.mrf.mxu0
    %v479 = vadd.f32 %v379, %v478
    %v480 = vpop.f32.mrf.mxu0
    %v481 = vadd.f32 %v379, %v480
    %482 = vdwg.mxu0
    %483 = vmatprep.subr.mxu0 0.0
    %484 = vmatpush1.msra.mxu0 0.0
    %485 = vmatprep.subr.mxu0 0.0
    %486 = vmatpush1.msra.mxu0 0.0
    %487 = vmatprep.subr.mxu0 0.0
    %488 = vmatpush1.msra.mxu0 0.0
    %489 = vmatprep.subr.mxu0 0.0
    %490 = vmatpush1.msra.mxu0 0.0
    %491 = vmatprep.subr.mxu0 0.0
    %492 = vmatpush1.msra.mxu0 0.0
    %493 = vmatprep.subr.mxu0 0.0
    %494 = vmatpush1.msra.mxu0 0.0
    %495 = vmatprep.subr.mxu0 0.0
    %496 = vmatpush1.msra.mxu0 0.0
    %497 = vmatprep.subr.mxu0 0.0
    %498 = vmatpush1.msra.mxu0 0.0
    %499 = vmatprep.subr.mxu0 0.0
    %500 = vmatpush1.msra.mxu0 0.0
    %501 = vmatprep.subr.mxu0 0.0
    %502 = vmatpush1.msra.mxu0 0.0
    %503 = vmatprep.subr.mxu0 0.0
    %504 = vmatpush1.msra.mxu0 0.0
    %505 = vmatprep.subr.mxu0 0.0
    %506 = vmatpush1.msra.mxu0 0.0
    %507 = vmatprep.subr.mxu0 %v340
    %508 = vmatpush1.msra.mxu0 %v339
    %509 = vmatprep.subr.mxu0 %v324
    %510 = vmatpush1.msra.mxu0 %v323
    %511 = vmatprep.subr.mxu0 %v308
    %512 = vmatpush1.msra.mxu0 %v307
    %513 = vmatprep.subr.mxu0 %v292
    %514 = vmatpush1.msra.mxu0 %v291
    %515 = vmatprep.subr.mxu0 0.0
    %516 = vmatpush2.msra.mxu0 0.0
    %517 = vmatprep.subr.mxu0 0.0
    %518 = vmatpush2.msra.mxu0 0.0
    %519 = vmatprep.subr.mxu0 0.0
    %520 = vmatpush2.msra.mxu0 0.0
    %521 = vmatprep.subr.mxu0 0.0
    %522 = vmatpush2.msra.mxu0 0.0
    %523 = vmatprep.subr.mxu0 0.0
    %524 = vmatpush2.msra.mxu0 0.0
    %525 = vmatprep.subr.mxu0 0.0
    %526 = vmatpush2.msra.mxu0 0.0
    %527 = vmatprep.subr.mxu0 0.0
    %528 = vmatpush2.msra.mxu0 0.0
    %529 = vmatprep.subr.mxu0 0.0
    %530 = vmatpush2.msra.mxu0 0.0
    %531 = vmatprep.subr.mxu0 0.0
    %532 = vmatpush2.msra.mxu0 0.0
    %533 = vmatprep.subr.mxu0 0.0
    %534 = vmatpush2.msra.mxu0 0.0
    %535 = vmatprep.subr.mxu0 0.0
    %536 = vmatpush2.msra.mxu0 0.0
    %537 = vmatprep.subr.mxu0 0.0
    %538 = vmatpush2.msra.mxu0 0.0
    %539 = vmatprep.subr.mxu0 0.0
    %540 = vmatpush2.msra.mxu0 0.0
    %541 = vmatprep.subr.mxu0 0.0
    %542 = vmatpush2.msra.mxu0 0.0
    %543 = vmatprep.subr.mxu0 0.0
    %544 = vmatpush2.msra.mxu0 0.0
    %545 = vmatprep.subr.mxu0 0.0
    %546 = vmatpush2.msra.mxu0 0.0
    %547 = vmatprep.mubr.f32.mxu0 0.0
    %548 = vmatmul.mubr.f32.gmra.mxu0 %v383
    %v549 = vpop.f32.mrf.mxu0
    %v550 = vadd.f32 %v364, %v549
    %v551 = vpop.f32.mrf.mxu0
    %v552 = vadd.f32 %v364, %v551
    %553 = vmatprep.mubr.f32.mxu0 0.0
    %554 = vmatmul.mubr.f32.gmra.mxu0 %v386
    %v555 = vpop.f32.mrf.mxu0
    %v556 = vadd.f32 %v369, %v555
    %v557 = vpop.f32.mrf.mxu0
    %v558 = vadd.f32 %v369, %v557
    %559 = vmatprep.mubr.f32.mxu0 0.0
    %560 = vmatmul.mubr.f32.gmra.mxu0 %v389
    %v561 = vpop.f32.mrf.mxu0
    %v562 = vadd.f32 %v374, %v561
    %v563 = vpop.f32.mrf.mxu0
    %v564 = vadd.f32 %v374, %v563
    %565 = vmatprep.mubr.f32.mxu0 0.0
    %566 = vmatmul.mubr.f32.gmra.mxu0 %v392
    %v567 = vpop.f32.mrf.mxu0
    %v568 = vadd.f32 %v379, %v567
    %v569 = vpop.f32.mrf.mxu0
    %v570 = vadd.f32 %v379, %v569
    %571 = vdwg.mxu0
    %572 = vmatprep.subr.mxu0 0.0
    %573 = vmatpush1.msra.mxu0 0.0
    %574 = vmatprep.subr.mxu0 0.0
    %575 = vmatpush1.msra.mxu0 0.0
    %576 = vmatprep.subr.mxu0 0.0
    %577 = vmatpush1.msra.mxu0 0.0
    %578 = vmatprep.subr.mxu0 0.0
    %579 = vmatpush1.msra.mxu0 0.0
    %580 = vmatprep.subr.mxu0 0.0
    %581 = vmatpush1.msra.mxu0 0.0
    %582 = vmatprep.subr.mxu0 0.0
    %583 = vmatpush1.msra.mxu0 0.0
    %584 = vmatprep.subr.mxu0 0.0
    %585 = vmatpush1.msra.mxu0 0.0
    %586 = vmatprep.subr.mxu0 0.0
    %587 = vmatpush1.msra.mxu0 0.0
    %588 = vmatprep.subr.mxu0 0.0
    %589 = vmatpush1.msra.mxu0 0.0
    %590 = vmatprep.subr.mxu0 0.0
    %591 = vmatpush1.msra.mxu0 0.0
    %592 = vmatprep.subr.mxu0 0.0
    %593 = vmatpush1.msra.mxu0 0.0
    %594 = vmatprep.subr.mxu0 0.0
    %595 = vmatpush1.msra.mxu0 0.0
    %596 = vmatprep.subr.mxu0 %v342
    %597 = vmatpush1.msra.mxu0 %v341
    %598 = vmatprep.subr.mxu0 %v326
    %599 = vmatpush1.msra.mxu0 %v325
    %600 = vmatprep.subr.mxu0 %v310
    %601 = vmatpush1.msra.mxu0 %v309
    %602 = vmatprep.subr.mxu0 %v294
    %603 = vmatpush1.msra.mxu0 %v293
    %604 = vmatprep.subr.mxu0 0.0
    %605 = vmatpush2.msra.mxu0 0.0
    %606 = vmatprep.subr.mxu0 0.0
    %607 = vmatpush2.msra.mxu0 0.0
    %608 = vmatprep.subr.mxu0 0.0
    %609 = vmatpush2.msra.mxu0 0.0
    %610 = vmatprep.subr.mxu0 0.0
    %611 = vmatpush2.msra.mxu0 0.0
    %612 = vmatprep.subr.mxu0 0.0
    %613 = vmatpush2.msra.mxu0 0.0
    %614 = vmatprep.subr.mxu0 0.0
    %615 = vmatpush2.msra.mxu0 0.0
    %616 = vmatprep.subr.mxu0 0.0
    %617 = vmatpush2.msra.mxu0 0.0
    %618 = vmatprep.subr.mxu0 0.0
    %619 = vmatpush2.msra.mxu0 0.0
    %620 = vmatprep.subr.mxu0 0.0
    %621 = vmatpush2.msra.mxu0 0.0
    %622 = vmatprep.subr.mxu0 0.0
    %623 = vmatpush2.msra.mxu0 0.0
    %624 = vmatprep.subr.mxu0 0.0
    %625 = vmatpush2.msra.mxu0 0.0
    %626 = vmatprep.subr.mxu0 0.0
    %627 = vmatpush2.msra.mxu0 0.0
    %628 = vmatprep.subr.mxu0 0.0
    %629 = vmatpush2.msra.mxu0 0.0
    %630 = vmatprep.subr.mxu0 0.0
    %631 = vmatpush2.msra.mxu0 0.0
    %632 = vmatprep.subr.mxu0 0.0
    %633 = vmatpush2.msra.mxu0 0.0
    %634 = vmatprep.subr.mxu0 0.0
    %635 = vmatpush2.msra.mxu0 0.0
    %636 = vmatprep.mubr.f32.mxu0 0.0
    %637 = vmatmul.mubr.f32.gmra.mxu0 %v383
    %v638 = vpop.f32.mrf.mxu0
    %v639 = vadd.f32 %v364, %v638
    %v640 = vpop.f32.mrf.mxu0
    %v641 = vadd.f32 %v364, %v640
    %642 = vmatprep.mubr.f32.mxu0 0.0
    %643 = vmatmul.mubr.f32.gmra.mxu0 %v386
    %v644 = vpop.f32.mrf.mxu0
    %v645 = vadd.f32 %v369, %v644
    %v646 = vpop.f32.mrf.mxu0
    %v647 = vadd.f32 %v369, %v646
    %648 = vmatprep.mubr.f32.mxu0 0.0
    %649 = vmatmul.mubr.f32.gmra.mxu0 %v389
    %v650 = vpop.f32.mrf.mxu0
    %v651 = vadd.f32 %v374, %v650
    %v652 = vpop.f32.mrf.mxu0
    %v653 = vadd.f32 %v374, %v652
    %654 = vmatprep.mubr.f32.mxu0 0.0
    %655 = vmatmul.mubr.f32.gmra.mxu0 %v392
    %v656 = vpop.f32.mrf.mxu0
    %v657 = vadd.f32 %v379, %v656
    %v658 = vpop.f32.mrf.mxu0
    %v659 = vadd.f32 %v379, %v658
    %660 = vdwg.mxu0
    %661 = vmatprep.subr.mxu0 0.0
    %662 = vmatpush1.msra.mxu0 0.0
    %663 = vmatprep.subr.mxu0 0.0
    %664 = vmatpush1.msra.mxu0 0.0
    %665 = vmatprep.subr.mxu0 0.0
    %666 = vmatpush1.msra.mxu0 0.0
    %667 = vmatprep.subr.mxu0 0.0
    %668 = vmatpush1.msra.mxu0 0.0
    %669 = vmatprep.subr.mxu0 0.0
    %670 = vmatpush1.msra.mxu0 0.0
    %671 = vmatprep.subr.mxu0 0.0
    %672 = vmatpush1.msra.mxu0 0.0
    %673 = vmatprep.subr.mxu0 0.0
    %674 = vmatpush1.msra.mxu0 0.0
    %675 = vmatprep.subr.mxu0 0.0
    %676 = vmatpush1.msra.mxu0 0.0
    %677 = vmatprep.subr.mxu0 0.0
    %678 = vmatpush1.msra.mxu0 0.0
    %679 = vmatprep.subr.mxu0 0.0
    %680 = vmatpush1.msra.mxu0 0.0
    %681 = vmatprep.subr.mxu0 0.0
    %682 = vmatpush1.msra.mxu0 0.0
    %683 = vmatprep.subr.mxu0 0.0
    %684 = vmatpush1.msra.mxu0 0.0
    %685 = vmatprep.subr.mxu0 %v344
    %686 = vmatpush1.msra.mxu0 %v343
    %687 = vmatprep.subr.mxu0 %v328
    %688 = vmatpush1.msra.mxu0 %v327
    %689 = vmatprep.subr.mxu0 %v312
    %690 = vmatpush1.msra.mxu0 %v311
    %691 = vmatprep.subr.mxu0 %v296
    %692 = vmatpush1.msra.mxu0 %v295
    %693 = vmatprep.subr.mxu0 0.0
    %694 = vmatpush2.msra.mxu0 0.0
    %695 = vmatprep.subr.mxu0 0.0
    %696 = vmatpush2.msra.mxu0 0.0
    %697 = vmatprep.subr.mxu0 0.0
    %698 = vmatpush2.msra.mxu0 0.0
    %699 = vmatprep.subr.mxu0 0.0
    %700 = vmatpush2.msra.mxu0 0.0
    %701 = vmatprep.subr.mxu0 0.0
    %702 = vmatpush2.msra.mxu0 0.0
    %703 = vmatprep.subr.mxu0 0.0
    %704 = vmatpush2.msra.mxu0 0.0
    %705 = vmatprep.subr.mxu0 0.0
    %706 = vmatpush2.msra.mxu0 0.0
    %707 = vmatprep.subr.mxu0 0.0
    %708 = vmatpush2.msra.mxu0 0.0
    %709 = vmatprep.subr.mxu0 0.0
    %710 = vmatpush2.msra.mxu0 0.0
    %711 = vmatprep.subr.mxu0 0.0
    %712 = vmatpush2.msra.mxu0 0.0
    %713 = vmatprep.subr.mxu0 0.0
    %714 = vmatpush2.msra.mxu0 0.0
    %715 = vmatprep.subr.mxu0 0.0
    %716 = vmatpush2.msra.mxu0 0.0
    %717 = vmatprep.subr.mxu0 0.0
    %718 = vmatpush2.msra.mxu0 0.0
    %719 = vmatprep.subr.mxu0 0.0
    %720 = vmatpush2.msra.mxu0 0.0
    %721 = vmatprep.subr.mxu0 0.0
    %722 = vmatpush2.msra.mxu0 0.0
    %723 = vmatprep.subr.mxu0 0.0
    %724 = vmatpush2.msra.mxu0 0.0
    %725 = vmatprep.mubr.f32.mxu0 0.0
    %726 = vmatmul.mubr.f32.gmra.mxu0 %v383
    %v727 = vpop.f32.mrf.mxu0
    %v728 = vadd.f32 %v364, %v727
    %v729 = vpop.f32.mrf.mxu0
    %v730 = vadd.f32 %v364, %v729
    %731 = vmatprep.mubr.f32.mxu0 0.0
    %732 = vmatmul.mubr.f32.gmra.mxu0 %v386
    %v733 = vpop.f32.mrf.mxu0
    %v734 = vadd.f32 %v369, %v733
    %v735 = vpop.f32.mrf.mxu0
    %v736 = vadd.f32 %v369, %v735
    %737 = vmatprep.mubr.f32.mxu0 0.0
    %738 = vmatmul.mubr.f32.gmra.mxu0 %v389
    %v739 = vpop.f32.mrf.mxu0
    %v740 = vadd.f32 %v374, %v739
    %v741 = vpop.f32.mrf.mxu0
    %v742 = vadd.f32 %v374, %v741
    %743 = vmatprep.mubr.f32.mxu0 0.0
    %744 = vmatmul.mubr.f32.gmra.mxu0 %v392
    %v745 = vpop.f32.mrf.mxu0
    %v746 = vadd.f32 %v379, %v745
    %v747 = vpop.f32.mrf.mxu0
    %v748 = vadd.f32 %v379, %v747
    %749 = vdwg.mxu0
    %750 = vmatprep.subr.mxu0 0.0
    %751 = vmatpush1.msra.mxu0 0.0
    %752 = vmatprep.subr.mxu0 0.0
    %753 = vmatpush1.msra.mxu0 0.0
    %754 = vmatprep.subr.mxu0 0.0
    %755 = vmatpush1.msra.mxu0 0.0
    %756 = vmatprep.subr.mxu0 0.0
    %757 = vmatpush1.msra.mxu0 0.0
    %758 = vmatprep.subr.mxu0 0.0
    %759 = vmatpush1.msra.mxu0 0.0
    %760 = vmatprep.subr.mxu0 0.0
    %761 = vmatpush1.msra.mxu0 0.0
    %762 = vmatprep.subr.mxu0 0.0
    %763 = vmatpush1.msra.mxu0 0.0
    %764 = vmatprep.subr.mxu0 0.0
    %765 = vmatpush1.msra.mxu0 0.0
    %766 = vmatprep.subr.mxu0 0.0
    %767 = vmatpush1.msra.mxu0 0.0
    %768 = vmatprep.subr.mxu0 0.0
    %769 = vmatpush1.msra.mxu0 0.0
    %770 = vmatprep.subr.mxu0 0.0
    %771 = vmatpush1.msra.mxu0 0.0
    %772 = vmatprep.subr.mxu0 0.0
    %773 = vmatpush1.msra.mxu0 0.0
    %774 = vmatprep.subr.mxu0 %v346
    %775 = vmatpush1.msra.mxu0 %v345
    %776 = vmatprep.subr.mxu0 %v330
    %777 = vmatpush1.msra.mxu0 %v329
    %778 = vmatprep.subr.mxu0 %v314
    %779 = vmatpush1.msra.mxu0 %v313
    %780 = vmatprep.subr.mxu0 %v298
    %781 = vmatpush1.msra.mxu0 %v297
    %782 = vmatprep.subr.mxu0 0.0
    %783 = vmatpush2.msra.mxu0 0.0
    %784 = vmatprep.subr.mxu0 0.0
    %785 = vmatpush2.msra.mxu0 0.0
    %786 = vmatprep.subr.mxu0 0.0
    %787 = vmatpush2.msra.mxu0 0.0
    %788 = vmatprep.subr.mxu0 0.0
    %789 = vmatpush2.msra.mxu0 0.0
    %790 = vmatprep.subr.mxu0 0.0
    %791 = vmatpush2.msra.mxu0 0.0
    %792 = vmatprep.subr.mxu0 0.0
    %793 = vmatpush2.msra.mxu0 0.0
    %794 = vmatprep.subr.mxu0 0.0
    %795 = vmatpush2.msra.mxu0 0.0
    %796 = vmatprep.subr.mxu0 0.0
    %797 = vmatpush2.msra.mxu0 0.0
    %798 = vmatprep.subr.mxu0 0.0
    %799 = vmatpush2.msra.mxu0 0.0
    %800 = vmatprep.subr.mxu0 0.0
    %801 = vmatpush2.msra.mxu0 0.0
    %802 = vmatprep.subr.mxu0 0.0
    %803 = vmatpush2.msra.mxu0 0.0
    %804 = vmatprep.subr.mxu0 0.0
    %805 = vmatpush2.msra.mxu0 0.0
    %806 = vmatprep.subr.mxu0 0.0
    %807 = vmatpush2.msra.mxu0 0.0
    %808 = vmatprep.subr.mxu0 0.0
    %809 = vmatpush2.msra.mxu0 0.0
    %810 = vmatprep.subr.mxu0 0.0
    %811 = vmatpush2.msra.mxu0 0.0
    %812 = vmatprep.subr.mxu0 0.0
    %813 = vmatpush2.msra.mxu0 0.0
    %814 = vmatprep.mubr.f32.mxu0 0.0
    %815 = vmatmul.mubr.f32.gmra.mxu0 %v383
    %v816 = vpop.f32.mrf.mxu0
    %v817 = vadd.f32 %v364, %v816
    %v818 = vpop.f32.mrf.mxu0
    %v819 = vadd.f32 %v364, %v818
    %820 = vmatprep.mubr.f32.mxu0 0.0
    %821 = vmatmul.mubr.f32.gmra.mxu0 %v386
    %v822 = vpop.f32.mrf.mxu0
    %v823 = vadd.f32 %v369, %v822
    %v824 = vpop.f32.mrf.mxu0
    %v825 = vadd.f32 %v369, %v824
    %826 = vmatprep.mubr.f32.mxu0 0.0
    %827 = vmatmul.mubr.f32.gmra.mxu0 %v389
    %v828 = vpop.f32.mrf.mxu0
    %v829 = vadd.f32 %v374, %v828
    %v830 = vpop.f32.mrf.mxu0
    %v831 = vadd.f32 %v374, %v830
    %832 = vmatprep.mubr.f32.mxu0 0.0
    %833 = vmatmul.mubr.f32.gmra.mxu0 %v392
    %v834 = vpop.f32.mrf.mxu0
    %v835 = vadd.f32 %v379, %v834
    %v836 = vpop.f32.mrf.mxu0
    %v837 = vadd.f32 %v379, %v836
    %838 = vdwg.mxu0
    %839 = vmatprep.subr.mxu0 0.0
    %840 = vmatpush1.msra.mxu0 0.0
    %841 = vmatprep.subr.mxu0 0.0
    %842 = vmatpush1.msra.mxu0 0.0
    %843 = vmatprep.subr.mxu0 0.0
    %844 = vmatpush1.msra.mxu0 0.0
    %845 = vmatprep.subr.mxu0 0.0
    %846 = vmatpush1.msra.mxu0 0.0
    %847 = vmatprep.subr.mxu0 0.0
    %848 = vmatpush1.msra.mxu0 0.0
    %849 = vmatprep.subr.mxu0 0.0
    %850 = vmatpush1.msra.mxu0 0.0
    %851 = vmatprep.subr.mxu0 0.0
    %852 = vmatpush1.msra.mxu0 0.0
    %853 = vmatprep.subr.mxu0 0.0
    %854 = vmatpush1.msra.mxu0 0.0
    %855 = vmatprep.subr.mxu0 0.0
    %856 = vmatpush1.msra.mxu0 0.0
    %857 = vmatprep.subr.mxu0 0.0
    %858 = vmatpush1.msra.mxu0 0.0
    %859 = vmatprep.subr.mxu0 0.0
    %860 = vmatpush1.msra.mxu0 0.0
    %861 = vmatprep.subr.mxu0 0.0
    %862 = vmatpush1.msra.mxu0 0.0
    %863 = vmatprep.subr.mxu0 %v348
    %864 = vmatpush1.msra.mxu0 %v347
    %865 = vmatprep.subr.mxu0 %v332
    %866 = vmatpush1.msra.mxu0 %v331
    %867 = vmatprep.subr.mxu0 %v316
    %868 = vmatpush1.msra.mxu0 %v315
    %869 = vmatprep.subr.mxu0 %v300
    %870 = vmatpush1.msra.mxu0 %v299
    %871 = vmatprep.subr.mxu0 0.0
    %872 = vmatpush2.msra.mxu0 0.0
    %873 = vmatprep.subr.mxu0 0.0
    %874 = vmatpush2.msra.mxu0 0.0
    %875 = vmatprep.subr.mxu0 0.0
    %876 = vmatpush2.msra.mxu0 0.0
    %877 = vmatprep.subr.mxu0 0.0
    %878 = vmatpush2.msra.mxu0 0.0
    %879 = vmatprep.subr.mxu0 0.0
    %880 = vmatpush2.msra.mxu0 0.0
    %881 = vmatprep.subr.mxu0 0.0
    %882 = vmatpush2.msra.mxu0 0.0
    %883 = vmatprep.subr.mxu0 0.0
    %884 = vmatpush2.msra.mxu0 0.0
    %885 = vmatprep.subr.mxu0 0.0
    %886 = vmatpush2.msra.mxu0 0.0
    %887 = vmatprep.subr.mxu0 0.0
    %888 = vmatpush2.msra.mxu0 0.0
    %889 = vmatprep.subr.mxu0 0.0
    %890 = vmatpush2.msra.mxu0 0.0
    %891 = vmatprep.subr.mxu0 0.0
    %892 = vmatpush2.msra.mxu0 0.0
    %893 = vmatprep.subr.mxu0 0.0
    %894 = vmatpush2.msra.mxu0 0.0
    %895 = vmatprep.subr.mxu0 0.0
    %896 = vmatpush2.msra.mxu0 0.0
    %897 = vmatprep.subr.mxu0 0.0
    %898 = vmatpush2.msra.mxu0 0.0
    %899 = vmatprep.subr.mxu0 0.0
    %900 = vmatpush2.msra.mxu0 0.0
    %901 = vmatprep.subr.mxu0 0.0
    %902 = vmatpush2.msra.mxu0 0.0
    %903 = vmatprep.mubr.f32.mxu0 0.0
    %904 = vmatmul.mubr.f32.gmra.mxu0 %v383
    %v905 = vpop.f32.mrf.mxu0
    %v906 = vadd.f32 %v364, %v905
    %v907 = vpop.f32.mrf.mxu0
    %v908 = vadd.f32 %v364, %v907
    %909 = vmatprep.mubr.f32.mxu0 0.0
    %910 = vmatmul.mubr.f32.gmra.mxu0 %v386
    %v911 = vpop.f32.mrf.mxu0
    %v912 = vadd.f32 %v369, %v911
    %v913 = vpop.f32.mrf.mxu0
    %v914 = vadd.f32 %v369, %v913
    %915 = vmatprep.mubr.f32.mxu0 0.0
    %916 = vmatmul.mubr.f32.gmra.mxu0 %v389
    %v917 = vpop.f32.mrf.mxu0
    %v918 = vadd.f32 %v374, %v917
    %v919 = vpop.f32.mrf.mxu0
    %v920 = vadd.f32 %v374, %v919
    %921 = vmatprep.mubr.f32.mxu0 0.0
    %922 = vmatmul.mubr.f32.gmra.mxu0 %v392
    %v923 = vpop.f32.mrf.mxu0
    %v924 = vadd.f32 %v379, %v923
    %v925 = vpop.f32.mrf.mxu0
    %v926 = vadd.f32 %v379, %v925
    %927 = vdwg.mxu0
    %928 = vmatprep.subr.mxu0 0.0
    %929 = vmatpush1.msra.mxu0 0.0
    %930 = vmatprep.subr.mxu0 0.0
    %931 = vmatpush1.msra.mxu0 0.0
    %932 = vmatprep.subr.mxu0 0.0
    %933 = vmatpush1.msra.mxu0 0.0
    %934 = vmatprep.subr.mxu0 0.0
    %935 = vmatpush1.msra.mxu0 0.0
    %936 = vmatprep.subr.mxu0 0.0
    %937 = vmatpush1.msra.mxu0 0.0
    %938 = vmatprep.subr.mxu0 0.0
    %939 = vmatpush1.msra.mxu0 0.0
    %940 = vmatprep.subr.mxu0 0.0
    %941 = vmatpush1.msra.mxu0 0.0
    %942 = vmatprep.subr.mxu0 0.0
    %943 = vmatpush1.msra.mxu0 0.0
    %944 = vmatprep.subr.mxu0 0.0
    %945 = vmatpush1.msra.mxu0 0.0
    %946 = vmatprep.subr.mxu0 0.0
    %947 = vmatpush1.msra.mxu0 0.0
    %948 = vmatprep.subr.mxu0 0.0
    %949 = vmatpush1.msra.mxu0 0.0
    %950 = vmatprep.subr.mxu0 0.0
    %951 = vmatpush1.msra.mxu0 0.0
    %952 = vmatprep.subr.mxu0 %v350
    %953 = vmatpush1.msra.mxu0 %v349
    %954 = vmatprep.subr.mxu0 %v334
    %955 = vmatpush1.msra.mxu0 %v333
    %956 = vmatprep.subr.mxu0 %v318
    %957 = vmatpush1.msra.mxu0 %v317
    %958 = vmatprep.subr.mxu0 %v302
    %959 = vmatpush1.msra.mxu0 %v301
    %960 = vmatprep.subr.mxu0 0.0
    %961 = vmatpush2.msra.mxu0 0.0
    %962 = vmatprep.subr.mxu0 0.0
    %963 = vmatpush2.msra.mxu0 0.0
    %964 = vmatprep.subr.mxu0 0.0
    %965 = vmatpush2.msra.mxu0 0.0
    %966 = vmatprep.subr.mxu0 0.0
    %967 = vmatpush2.msra.mxu0 0.0
    %968 = vmatprep.subr.mxu0 0.0
    %969 = vmatpush2.msra.mxu0 0.0
    %970 = vmatprep.subr.mxu0 0.0
    %971 = vmatpush2.msra.mxu0 0.0
    %972 = vmatprep.subr.mxu0 0.0
    %973 = vmatpush2.msra.mxu0 0.0
    %974 = vmatprep.subr.mxu0 0.0
    %975 = vmatpush2.msra.mxu0 0.0
    %976 = vmatprep.subr.mxu0 0.0
    %977 = vmatpush2.msra.mxu0 0.0
    %978 = vmatprep.subr.mxu0 0.0
    %979 = vmatpush2.msra.mxu0 0.0
    %980 = vmatprep.subr.mxu0 0.0
    %981 = vmatpush2.msra.mxu0 0.0
    %982 = vmatprep.subr.mxu0 0.0
    %983 = vmatpush2.msra.mxu0 0.0
    %984 = vmatprep.subr.mxu0 0.0
    %985 = vmatpush2.msra.mxu0 0.0
    %986 = vmatprep.subr.mxu0 0.0
    %987 = vmatpush2.msra.mxu0 0.0
    %988 = vmatprep.subr.mxu0 0.0
    %989 = vmatpush2.msra.mxu0 0.0
    %990 = vmatprep.subr.mxu0 0.0
    %991 = vmatpush2.msra.mxu0 0.0
    %992 = vmatprep.mubr.f32.mxu0 0.0
    %993 = vmatmul.mubr.f32.gmra.mxu0 %v383
    %v994 = vpop.f32.mrf.mxu0
    %v995 = vadd.f32 %v364, %v994
    %v996 = vpop.f32.mrf.mxu0
    %v997 = vadd.f32 %v364, %v996
    %998 = vmatprep.mubr.f32.mxu0 0.0
    %999 = vmatmul.mubr.f32.gmra.mxu0 %v386
    %v1000 = vpop.f32.mrf.mxu0
    %v1001 = vadd.f32 %v369, %v1000
    %v1002 = vpop.f32.mrf.mxu0
    %v1003 = vadd.f32 %v369, %v1002
    %1004 = vmatprep.mubr.f32.mxu0 0.0
    %1005 = vmatmul.mubr.f32.gmra.mxu0 %v389
    %v1006 = vpop.f32.mrf.mxu0
    %v1007 = vadd.f32 %v374, %v1006
    %v1008 = vpop.f32.mrf.mxu0
    %v1009 = vadd.f32 %v374, %v1008
    %1010 = vmatprep.mubr.f32.mxu0 0.0
    %1011 = vmatmul.mubr.f32.gmra.mxu0 %v392
    %v1012 = vpop.f32.mrf.mxu0
    %v1013 = vadd.f32 %v379, %v1012
    %v1014 = vpop.f32.mrf.mxu0
    %v1015 = vadd.f32 %v379, %v1014
    %1016 = vdwg.mxu0
    %1017 = vmatprep.subr.mxu0 0.0
    %1018 = vmatpush1.msra.mxu0 0.0
    %1019 = vmatprep.subr.mxu0 0.0
    %1020 = vmatpush1.msra.mxu0 0.0
    %1021 = vmatprep.subr.mxu0 0.0
    %1022 = vmatpush1.msra.mxu0 0.0
    %1023 = vmatprep.subr.mxu0 0.0
    %1024 = vmatpush1.msra.mxu0 0.0
    %1025 = vmatprep.subr.mxu0 0.0
    %1026 = vmatpush1.msra.mxu0 0.0
    %1027 = vmatprep.subr.mxu0 0.0
    %1028 = vmatpush1.msra.mxu0 0.0
    %1029 = vmatprep.subr.mxu0 0.0
    %1030 = vmatpush1.msra.mxu0 0.0
    %1031 = vmatprep.subr.mxu0 0.0
    %1032 = vmatpush1.msra.mxu0 0.0
    %1033 = vmatprep.subr.mxu0 0.0
    %1034 = vmatpush1.msra.mxu0 0.0
    %1035 = vmatprep.subr.mxu0 0.0
    %1036 = vmatpush1.msra.mxu0 0.0
    %1037 = vmatprep.subr.mxu0 0.0
    %1038 = vmatpush1.msra.mxu0 0.0
    %1039 = vmatprep.subr.mxu0 0.0
    %1040 = vmatpush1.msra.mxu0 0.0
    %1041 = vmatprep.subr.mxu0 %v352
    %1042 = vmatpush1.msra.mxu0 %v351
    %1043 = vmatprep.subr.mxu0 %v336
    %1044 = vmatpush1.msra.mxu0 %v335
    %1045 = vmatprep.subr.mxu0 %v320
    %1046 = vmatpush1.msra.mxu0 %v319
    %1047 = vmatprep.subr.mxu0 %v304
    %1048 = vmatpush1.msra.mxu0 %v303
    %1049 = vmatprep.subr.mxu0 0.0
    %1050 = vmatpush2.msra.mxu0 0.0
    %1051 = vmatprep.subr.mxu0 0.0
    %1052 = vmatpush2.msra.mxu0 0.0
    %1053 = vmatprep.subr.mxu0 0.0
    %1054 = vmatpush2.msra.mxu0 0.0
    %1055 = vmatprep.subr.mxu0 0.0
    %1056 = vmatpush2.msra.mxu0 0.0
    %1057 = vmatprep.subr.mxu0 0.0
    %1058 = vmatpush2.msra.mxu0 0.0
    %1059 = vmatprep.subr.mxu0 0.0
    %1060 = vmatpush2.msra.mxu0 0.0
    %1061 = vmatprep.subr.mxu0 0.0
    %1062 = vmatpush2.msra.mxu0 0.0
    %1063 = vmatprep.subr.mxu0 0.0
    %1064 = vmatpush2.msra.mxu0 0.0
    %1065 = vmatprep.subr.mxu0 0.0
    %1066 = vmatpush2.msra.mxu0 0.0
    %1067 = vmatprep.subr.mxu0 0.0
    %1068 = vmatpush2.msra.mxu0 0.0
    %1069 = vmatprep.subr.mxu0 0.0
    %1070 = vmatpush2.msra.mxu0 0.0
    %1071 = vmatprep.subr.mxu0 0.0
    %1072 = vmatpush2.msra.mxu0 0.0
    %1073 = vmatprep.subr.mxu0 0.0
    %1074 = vmatpush2.msra.mxu0 0.0
    %1075 = vmatprep.subr.mxu0 0.0
    %1076 = vmatpush2.msra.mxu0 0.0
    %1077 = vmatprep.subr.mxu0 0.0
    %1078 = vmatpush2.msra.mxu0 0.0
    %1079 = vmatprep.subr.mxu0 0.0
    %1080 = vmatpush2.msra.mxu0 0.0
    %1081 = vmatprep.mubr.f32.mxu0 0.0
    %1082 = vmatmul.mubr.f32.gmra.mxu0 %v383
    %v1083 = vpop.f32.mrf.mxu0
    %v1084 = vadd.f32 %v364, %v1083
    %v1085 = vpop.f32.mrf.mxu0
    %v1086 = vadd.f32 %v364, %v1085
    %1087 = vmatprep.mubr.f32.mxu0 0.0
    %1088 = vmatmul.mubr.f32.gmra.mxu0 %v386
    %v1089 = vpop.f32.mrf.mxu0
    %v1090 = vadd.f32 %v369, %v1089
    %v1091 = vpop.f32.mrf.mxu0
    %v1092 = vadd.f32 %v369, %v1091
    %1093 = vmatprep.mubr.f32.mxu0 0.0
    %1094 = vmatmul.mubr.f32.gmra.mxu0 %v389
    %v1095 = vpop.f32.mrf.mxu0
    %v1096 = vadd.f32 %v374, %v1095
    %v1097 = vpop.f32.mrf.mxu0
    %v1098 = vadd.f32 %v374, %v1097
    %1099 = vmatprep.mubr.f32.mxu0 0.0
    %1100 = vmatmul.mubr.f32.gmra.mxu0 %v392
    %v1101 = vpop.f32.mrf.mxu0
    %v1102 = vadd.f32 %v379, %v1101
    %v1103 = vpop.f32.mrf.mxu0
    %v1104 = vadd.f32 %v379, %v1103
    %1105 = vdwg.mxu0
    %v1106 = vmax.f32 %v461, 0.0
    %v1107 = vmax.f32 %v463, 0.0
    %v1108 = vmax.f32 %v550, 0.0
    %v1109 = vmax.f32 %v552, 0.0
    %v1110 = vmax.f32 %v639, 0.0
    %v1111 = vmax.f32 %v641, 0.0
    %v1112 = vmax.f32 %v728, 0.0
    %v1113 = vmax.f32 %v730, 0.0
    %v1114 = vmax.f32 %v817, 0.0
    %v1115 = vmax.f32 %v819, 0.0
    %v1116 = vmax.f32 %v906, 0.0
    %v1117 = vmax.f32 %v908, 0.0
    %v1118 = vmax.f32 %v995, 0.0
    %v1119 = vmax.f32 %v997, 0.0
    %v1120 = vmax.f32 %v1084, 0.0
    %v1121 = vmax.f32 %v1086, 0.0
    %v1122 = vmax.f32 %v467, 0.0
    %v1123 = vmax.f32 %v469, 0.0
    %v1124 = vmax.f32 %v556, 0.0
    %v1125 = vmax.f32 %v558, 0.0
    %v1126 = vmax.f32 %v645, 0.0
    %v1127 = vmax.f32 %v647, 0.0
    %v1128 = vmax.f32 %v734, 0.0
    %v1129 = vmax.f32 %v736, 0.0
    %v1130 = vmax.f32 %v823, 0.0
    %v1131 = vmax.f32 %v825, 0.0
    %v1132 = vmax.f32 %v912, 0.0
    %v1133 = vmax.f32 %v914, 0.0
    %v1134 = vmax.f32 %v1001, 0.0
    %v1135 = vmax.f32 %v1003, 0.0
    %v1136 = vmax.f32 %v1090, 0.0
    %v1137 = vmax.f32 %v1092, 0.0
    %v1138 = vmax.f32 %v473, 0.0
    %v1139 = vmax.f32 %v475, 0.0
    %v1140 = vmax.f32 %v562, 0.0
    %v1141 = vmax.f32 %v564, 0.0
    %v1142 = vmax.f32 %v651, 0.0
    %v1143 = vmax.f32 %v653, 0.0
    %v1144 = vmax.f32 %v740, 0.0
    %v1145 = vmax.f32 %v742, 0.0
    %v1146 = vmax.f32 %v829, 0.0
    %v1147 = vmax.f32 %v831, 0.0
    %v1148 = vmax.f32 %v918, 0.0
    %v1149 = vmax.f32 %v920, 0.0
    %v1150 = vmax.f32 %v1007, 0.0
    %v1151 = vmax.f32 %v1009, 0.0
    %v1152 = vmax.f32 %v1096, 0.0
    %v1153 = vmax.f32 %v1098, 0.0
    %v1154 = vmax.f32 %v479, 0.0
    %v1155 = vmax.f32 %v481, 0.0
    %v1156 = vmax.f32 %v568, 0.0
    %v1157 = vmax.f32 %v570, 0.0
    %v1158 = vmax.f32 %v657, 0.0
    %v1159 = vmax.f32 %v659, 0.0
    %v1160 = vmax.f32 %v746, 0.0
    %v1161 = vmax.f32 %v748, 0.0
    %v1162 = vmax.f32 %v835, 0.0
    %v1163 = vmax.f32 %v837, 0.0
    %v1164 = vmax.f32 %v924, 0.0
    %v1165 = vmax.f32 %v926, 0.0
    %v1166 = vmax.f32 %v1013, 0.0
    %v1167 = vmax.f32 %v1015, 0.0
    %v1168 = vmax.f32 %v1102, 0.0
    %v1169 = vmax.f32 %v1104, 0.0
    %s1170 = scalar_lea.vmem %s3, 32
    %v1171 = vld [vmem:[%s1170] sm:$0xff]
    %v1172 = vld [vmem:[%s1170 + $0x8] sm:$0xff]
    %v1173 = vld [vmem:[%s1170 + $0x10] sm:$0xff]
    %v1174 = vld [vmem:[%s1170 + $0x18] sm:$0xff]
    %s1175 = scalar_lea.vmem %s4, 32
    %v1176 = vld [vmem:[%s1175] sm:$0xff]
    %v1177 = vld [vmem:[%s1175 + $0x8] sm:$0xff]
    %v1178 = vld [vmem:[%s1175 + $0x10] sm:$0xff]
    %v1179 = vld [vmem:[%s1175 + $0x18] sm:$0xff]
    %1181 = vset.pattern.permute.xlu0 0
    %1182 = vperm.xlu0 %1181, %v1176
    %v1183 = vpop.permute.xlu0 %1182
    %1186 = vset.pattern.permute.xlu0 0
    %1187 = vperm.xlu0 %1186, %v1177
    %v1188 = vpop.permute.xlu0 %1187
    %1191 = vset.pattern.permute.xlu0 0
    %1192 = vperm.xlu0 %1191, %v1178
    %v1193 = vpop.permute.xlu0 %1192
    %1196 = vset.pattern.permute.xlu0 0
    %1197 = vperm.xlu0 %1196, %v1179
    %v1198 = vpop.permute.xlu0 %1197
    %v1201 = vsel %vm381, %v1171, 0
    %v1204 = vsel %vm381, %v1172, 0
    %v1207 = vsel %vm381, %v1173, 0
    %v1210 = vsel %vm381, %v1174, 0
    %1212 = vmatprep.subr.mxu0 0.0
    %1213 = vmatpush1.msra.mxu0 0.0
    %1214 = vmatprep.subr.mxu0 0.0
    %1215 = vmatpush1.msra.mxu0 0.0
    %1216 = vmatprep.subr.mxu0 0.0
    %1217 = vmatpush1.msra.mxu0 0.0
    %1218 = vmatprep.subr.mxu0 0.0
    %1219 = vmatpush1.msra.mxu0 0.0
    %1220 = vmatprep.subr.mxu0 0.0
    %1221 = vmatpush1.msra.mxu0 0.0
    %1222 = vmatprep.subr.mxu0 0.0
    %1223 = vmatpush1.msra.mxu0 0.0
    %1224 = vmatprep.subr.mxu0 0.0
    %1225 = vmatpush1.msra.mxu0 0.0
    %1226 = vmatprep.subr.mxu0 0.0
    %1227 = vmatpush1.msra.mxu0 0.0
    %1228 = vmatprep.subr.mxu0 0.0
    %1229 = vmatpush1.msra.mxu0 0.0
    %1230 = vmatprep.subr.mxu0 0.0
    %1231 = vmatpush1.msra.mxu0 0.0
    %1232 = vmatprep.subr.mxu0 0.0
    %1233 = vmatpush1.msra.mxu0 0.0
    %1234 = vmatprep.subr.mxu0 0.0
    %1235 = vmatpush1.msra.mxu0 0.0
    %1236 = vmatprep.subr.mxu0 %v1155
    %1237 = vmatpush1.msra.mxu0 %v1154
    %1238 = vmatprep.subr.mxu0 %v1139
    %1239 = vmatpush1.msra.mxu0 %v1138
    %1240 = vmatprep.subr.mxu0 %v1123
    %1241 = vmatpush1.msra.mxu0 %v1122
    %1242 = vmatprep.subr.mxu0 %v1107
    %1243 = vmatpush1.msra.mxu0 %v1106
    %1244 = vmatprep.subr.mxu0 0.0
    %1245 = vmatpush2.msra.mxu0 0.0
    %1246 = vmatprep.subr.mxu0 0.0
    %1247 = vmatpush2.msra.mxu0 0.0
    %1248 = vmatprep.subr.mxu0 0.0
    %1249 = vmatpush2.msra.mxu0 0.0
    %1250 = vmatprep.subr.mxu0 0.0
    %1251 = vmatpush2.msra.mxu0 0.0
    %1252 = vmatprep.subr.mxu0 0.0
    %1253 = vmatpush2.msra.mxu0 0.0
    %1254 = vmatprep.subr.mxu0 0.0
    %1255 = vmatpush2.msra.mxu0 0.0
    %1256 = vmatprep.subr.mxu0 0.0
    %1257 = vmatpush2.msra.mxu0 0.0
    %1258 = vmatprep.subr.mxu0 0.0
    %1259 = vmatpush2.msra.mxu0 0.0
    %1260 = vmatprep.subr.mxu0 0.0
    %1261 = vmatpush2.msra.mxu0 0.0
    %1262 = vmatprep.subr.mxu0 0.0
    %1263 = vmatpush2.msra.mxu0 0.0
    %1264 = vmatprep.subr.mxu0 0.0
    %1265 = vmatpush2.msra.mxu0 0.0
    %1266 = vmatprep.subr.mxu0 0.0
    %1267 = vmatpush2.msra.mxu0 0.0
    %1268 = vmatprep.subr.mxu0 0.0
    %1269 = vmatpush2.msra.mxu0 0.0
    %1270 = vmatprep.subr.mxu0 0.0
    %1271 = vmatpush2.msra.mxu0 0.0
    %1272 = vmatprep.subr.mxu0 0.0
    %1273 = vmatpush2.msra.mxu0 0.0
    %1274 = vmatprep.subr.mxu0 0.0
    %1275 = vmatpush2.msra.mxu0 0.0
    %1276 = vmatprep.mubr.f32.mxu0 0.0
    %1277 = vmatmul.mubr.f32.gmra.mxu0 %v1201
    %v1278 = vpop.f32.mrf.mxu0
    %v1279 = vadd.f32 %v1183, %v1278
    %v1280 = vpop.f32.mrf.mxu0
    %v1281 = vadd.f32 %v1183, %v1280
    %1282 = vmatprep.mubr.f32.mxu0 0.0
    %1283 = vmatmul.mubr.f32.gmra.mxu0 %v1204
    %v1284 = vpop.f32.mrf.mxu0
    %v1285 = vadd.f32 %v1188, %v1284
    %v1286 = vpop.f32.mrf.mxu0
    %v1287 = vadd.f32 %v1188, %v1286
    %1288 = vmatprep.mubr.f32.mxu0 0.0
    %1289 = vmatmul.mubr.f32.gmra.mxu0 %v1207
    %v1290 = vpop.f32.mrf.mxu0
    %v1291 = vadd.f32 %v1193, %v1290
    %v1292 = vpop.f32.mrf.mxu0
    %v1293 = vadd.f32 %v1193, %v1292
    %1294 = vmatprep.mubr.f32.mxu0 0.0
    %1295 = vmatmul.mubr.f32.gmra.mxu0 %v1210
    %v1296 = vpop.f32.mrf.mxu0
    %v1297 = vadd.f32 %v1198, %v1296
    %v1298 = vpop.f32.mrf.mxu0
    %v1299 = vadd.f32 %v1198, %v1298
    %1300 = vdwg.mxu0
    %1301 = vmatprep.subr.mxu0 0.0
    %1302 = vmatpush1.msra.mxu0 0.0
    %1303 = vmatprep.subr.mxu0 0.0
    %1304 = vmatpush1.msra.mxu0 0.0
    %1305 = vmatprep.subr.mxu0 0.0
    %1306 = vmatpush1.msra.mxu0 0.0
    %1307 = vmatprep.subr.mxu0 0.0
    %1308 = vmatpush1.msra.mxu0 0.0
    %1309 = vmatprep.subr.mxu0 0.0
    %1310 = vmatpush1.msra.mxu0 0.0
    %1311 = vmatprep.subr.mxu0 0.0
    %1312 = vmatpush1.msra.mxu0 0.0
    %1313 = vmatprep.subr.mxu0 0.0
    %1314 = vmatpush1.msra.mxu0 0.0
    %1315 = vmatprep.subr.mxu0 0.0
    %1316 = vmatpush1.msra.mxu0 0.0
    %1317 = vmatprep.subr.mxu0 0.0
    %1318 = vmatpush1.msra.mxu0 0.0
    %1319 = vmatprep.subr.mxu0 0.0
    %1320 = vmatpush1.msra.mxu0 0.0
    %1321 = vmatprep.subr.mxu0 0.0
    %1322 = vmatpush1.msra.mxu0 0.0
    %1323 = vmatprep.subr.mxu0 0.0
    %1324 = vmatpush1.msra.mxu0 0.0
    %1325 = vmatprep.subr.mxu0 %v1157
    %1326 = vmatpush1.msra.mxu0 %v1156
    %1327 = vmatprep.subr.mxu0 %v1141
    %1328 = vmatpush1.msra.mxu0 %v1140
    %1329 = vmatprep.subr.mxu0 %v1125
    %1330 = vmatpush1.msra.mxu0 %v1124
    %1331 = vmatprep.subr.mxu0 %v1109
    %1332 = vmatpush1.msra.mxu0 %v1108
    %1333 = vmatprep.subr.mxu0 0.0
    %1334 = vmatpush2.msra.mxu0 0.0
    %1335 = vmatprep.subr.mxu0 0.0
    %1336 = vmatpush2.msra.mxu0 0.0
    %1337 = vmatprep.subr.mxu0 0.0
    %1338 = vmatpush2.msra.mxu0 0.0
    %1339 = vmatprep.subr.mxu0 0.0
    %1340 = vmatpush2.msra.mxu0 0.0
    %1341 = vmatprep.subr.mxu0 0.0
    %1342 = vmatpush2.msra.mxu0 0.0
    %1343 = vmatprep.subr.mxu0 0.0
    %1344 = vmatpush2.msra.mxu0 0.0
    %1345 = vmatprep.subr.mxu0 0.0
    %1346 = vmatpush2.msra.mxu0 0.0
    %1347 = vmatprep.subr.mxu0 0.0
    %1348 = vmatpush2.msra.mxu0 0.0
    %1349 = vmatprep.subr.mxu0 0.0
    %1350 = vmatpush2.msra.mxu0 0.0
    %1351 = vmatprep.subr.mxu0 0.0
    %1352 = vmatpush2.msra.mxu0 0.0
    %1353 = vmatprep.subr.mxu0 0.0
    %1354 = vmatpush2.msra.mxu0 0.0
    %1355 = vmatprep.subr.mxu0 0.0
    %1356 = vmatpush2.msra.mxu0 0.0
    %1357 = vmatprep.subr.mxu0 0.0
    %1358 = vmatpush2.msra.mxu0 0.0
    %1359 = vmatprep.subr.mxu0 0.0
    %1360 = vmatpush2.msra.mxu0 0.0
    %1361 = vmatprep.subr.mxu0 0.0
    %1362 = vmatpush2.msra.mxu0 0.0
    %1363 = vmatprep.subr.mxu0 0.0
    %1364 = vmatpush2.msra.mxu0 0.0
    %1365 = vmatprep.mubr.f32.mxu0 0.0
    %1366 = vmatmul.mubr.f32.gmra.mxu0 %v1201
    %v1367 = vpop.f32.mrf.mxu0
    %v1368 = vadd.f32 %v1183, %v1367
    %v1369 = vpop.f32.mrf.mxu0
    %v1370 = vadd.f32 %v1183, %v1369
    %1371 = vmatprep.mubr.f32.mxu0 0.0
    %1372 = vmatmul.mubr.f32.gmra.mxu0 %v1204
    %v1373 = vpop.f32.mrf.mxu0
    %v1374 = vadd.f32 %v1188, %v1373
    %v1375 = vpop.f32.mrf.mxu0
    %v1376 = vadd.f32 %v1188, %v1375
    %1377 = vmatprep.mubr.f32.mxu0 0.0
    %1378 = vmatmul.mubr.f32.gmra.mxu0 %v1207
    %v1379 = vpop.f32.mrf.mxu0
    %v1380 = vadd.f32 %v1193, %v1379
    %v1381 = vpop.f32.mrf.mxu0
    %v1382 = vadd.f32 %v1193, %v1381
    %1383 = vmatprep.mubr.f32.mxu0 0.0
    %1384 = vmatmul.mubr.f32.gmra.mxu0 %v1210
    %v1385 = vpop.f32.mrf.mxu0
    %v1386 = vadd.f32 %v1198, %v1385
    %v1387 = vpop.f32.mrf.mxu0
    %v1388 = vadd.f32 %v1198, %v1387
    %1389 = vdwg.mxu0
    %1390 = vmatprep.subr.mxu0 0.0
    %1391 = vmatpush1.msra.mxu0 0.0
    %1392 = vmatprep.subr.mxu0 0.0
    %1393 = vmatpush1.msra.mxu0 0.0
    %1394 = vmatprep.subr.mxu0 0.0
    %1395 = vmatpush1.msra.mxu0 0.0
    %1396 = vmatprep.subr.mxu0 0.0
    %1397 = vmatpush1.msra.mxu0 0.0
    %1398 = vmatprep.subr.mxu0 0.0
    %1399 = vmatpush1.msra.mxu0 0.0
    %1400 = vmatprep.subr.mxu0 0.0
    %1401 = vmatpush1.msra.mxu0 0.0
    %1402 = vmatprep.subr.mxu0 0.0
    %1403 = vmatpush1.msra.mxu0 0.0
    %1404 = vmatprep.subr.mxu0 0.0
    %1405 = vmatpush1.msra.mxu0 0.0
    %1406 = vmatprep.subr.mxu0 0.0
    %1407 = vmatpush1.msra.mxu0 0.0
    %1408 = vmatprep.subr.mxu0 0.0
    %1409 = vmatpush1.msra.mxu0 0.0
    %1410 = vmatprep.subr.mxu0 0.0
    %1411 = vmatpush1.msra.mxu0 0.0
    %1412 = vmatprep.subr.mxu0 0.0
    %1413 = vmatpush1.msra.mxu0 0.0
    %1414 = vmatprep.subr.mxu0 %v1159
    %1415 = vmatpush1.msra.mxu0 %v1158
    %1416 = vmatprep.subr.mxu0 %v1143
    %1417 = vmatpush1.msra.mxu0 %v1142
    %1418 = vmatprep.subr.mxu0 %v1127
    %1419 = vmatpush1.msra.mxu0 %v1126
    %1420 = vmatprep.subr.mxu0 %v1111
    %1421 = vmatpush1.msra.mxu0 %v1110
    %1422 = vmatprep.subr.mxu0 0.0
    %1423 = vmatpush2.msra.mxu0 0.0
    %1424 = vmatprep.subr.mxu0 0.0
    %1425 = vmatpush2.msra.mxu0 0.0
    %1426 = vmatprep.subr.mxu0 0.0
    %1427 = vmatpush2.msra.mxu0 0.0
    %1428 = vmatprep.subr.mxu0 0.0
    %1429 = vmatpush2.msra.mxu0 0.0
    %1430 = vmatprep.subr.mxu0 0.0
    %1431 = vmatpush2.msra.mxu0 0.0
    %1432 = vmatprep.subr.mxu0 0.0
    %1433 = vmatpush2.msra.mxu0 0.0
    %1434 = vmatprep.subr.mxu0 0.0
    %1435 = vmatpush2.msra.mxu0 0.0
    %1436 = vmatprep.subr.mxu0 0.0
    %1437 = vmatpush2.msra.mxu0 0.0
    %1438 = vmatprep.subr.mxu0 0.0
    %1439 = vmatpush2.msra.mxu0 0.0
    %1440 = vmatprep.subr.mxu0 0.0
    %1441 = vmatpush2.msra.mxu0 0.0
    %1442 = vmatprep.subr.mxu0 0.0
    %1443 = vmatpush2.msra.mxu0 0.0
    %1444 = vmatprep.subr.mxu0 0.0
    %1445 = vmatpush2.msra.mxu0 0.0
    %1446 = vmatprep.subr.mxu0 0.0
    %1447 = vmatpush2.msra.mxu0 0.0
    %1448 = vmatprep.subr.mxu0 0.0
    %1449 = vmatpush2.msra.mxu0 0.0
    %1450 = vmatprep.subr.mxu0 0.0
    %1451 = vmatpush2.msra.mxu0 0.0
    %1452 = vmatprep.subr.mxu0 0.0
    %1453 = vmatpush2.msra.mxu0 0.0
    %1454 = vmatprep.mubr.f32.mxu0 0.0
    %1455 = vmatmul.mubr.f32.gmra.mxu0 %v1201
    %v1456 = vpop.f32.mrf.mxu0
    %v1457 = vadd.f32 %v1183, %v1456
    %v1458 = vpop.f32.mrf.mxu0
    %v1459 = vadd.f32 %v1183, %v1458
    %1460 = vmatprep.mubr.f32.mxu0 0.0
    %1461 = vmatmul.mubr.f32.gmra.mxu0 %v1204
    %v1462 = vpop.f32.mrf.mxu0
    %v1463 = vadd.f32 %v1188, %v1462
    %v1464 = vpop.f32.mrf.mxu0
    %v1465 = vadd.f32 %v1188, %v1464
    %1466 = vmatprep.mubr.f32.mxu0 0.0
    %1467 = vmatmul.mubr.f32.gmra.mxu0 %v1207
    %v1468 = vpop.f32.mrf.mxu0
    %v1469 = vadd.f32 %v1193, %v1468
    %v1470 = vpop.f32.mrf.mxu0
    %v1471 = vadd.f32 %v1193, %v1470
    %1472 = vmatprep.mubr.f32.mxu0 0.0
    %1473 = vmatmul.mubr.f32.gmra.mxu0 %v1210
    %v1474 = vpop.f32.mrf.mxu0
    %v1475 = vadd.f32 %v1198, %v1474
    %v1476 = vpop.f32.mrf.mxu0
    %v1477 = vadd.f32 %v1198, %v1476
    %1478 = vdwg.mxu0
    %1479 = vmatprep.subr.mxu0 0.0
    %1480 = vmatpush1.msra.mxu0 0.0
    %1481 = vmatprep.subr.mxu0 0.0
    %1482 = vmatpush1.msra.mxu0 0.0
    %1483 = vmatprep.subr.mxu0 0.0
    %1484 = vmatpush1.msra.mxu0 0.0
    %1485 = vmatprep.subr.mxu0 0.0
    %1486 = vmatpush1.msra.mxu0 0.0
    %1487 = vmatprep.subr.mxu0 0.0
    %1488 = vmatpush1.msra.mxu0 0.0
    %1489 = vmatprep.subr.mxu0 0.0
    %1490 = vmatpush1.msra.mxu0 0.0
    %1491 = vmatprep.subr.mxu0 0.0
    %1492 = vmatpush1.msra.mxu0 0.0
    %1493 = vmatprep.subr.mxu0 0.0
    %1494 = vmatpush1.msra.mxu0 0.0
    %1495 = vmatprep.subr.mxu0 0.0
    %1496 = vmatpush1.msra.mxu0 0.0
    %1497 = vmatprep.subr.mxu0 0.0
    %1498 = vmatpush1.msra.mxu0 0.0
    %1499 = vmatprep.subr.mxu0 0.0
    %1500 = vmatpush1.msra.mxu0 0.0
    %1501 = vmatprep.subr.mxu0 0.0
    %1502 = vmatpush1.msra.mxu0 0.0
    %1503 = vmatprep.subr.mxu0 %v1161
    %1504 = vmatpush1.msra.mxu0 %v1160
    %1505 = vmatprep.subr.mxu0 %v1145
    %1506 = vmatpush1.msra.mxu0 %v1144
    %1507 = vmatprep.subr.mxu0 %v1129
    %1508 = vmatpush1.msra.mxu0 %v1128
    %1509 = vmatprep.subr.mxu0 %v1113
    %1510 = vmatpush1.msra.mxu0 %v1112
    %1511 = vmatprep.subr.mxu0 0.0
    %1512 = vmatpush2.msra.mxu0 0.0
    %1513 = vmatprep.subr.mxu0 0.0
    %1514 = vmatpush2.msra.mxu0 0.0
    %1515 = vmatprep.subr.mxu0 0.0
    %1516 = vmatpush2.msra.mxu0 0.0
    %1517 = vmatprep.subr.mxu0 0.0
    %1518 = vmatpush2.msra.mxu0 0.0
    %1519 = vmatprep.subr.mxu0 0.0
    %1520 = vmatpush2.msra.mxu0 0.0
    %1521 = vmatprep.subr.mxu0 0.0
    %1522 = vmatpush2.msra.mxu0 0.0
    %1523 = vmatprep.subr.mxu0 0.0
    %1524 = vmatpush2.msra.mxu0 0.0
    %1525 = vmatprep.subr.mxu0 0.0
    %1526 = vmatpush2.msra.mxu0 0.0
    %1527 = vmatprep.subr.mxu0 0.0
    %1528 = vmatpush2.msra.mxu0 0.0
    %1529 = vmatprep.subr.mxu0 0.0
    %1530 = vmatpush2.msra.mxu0 0.0
    %1531 = vmatprep.subr.mxu0 0.0
    %1532 = vmatpush2.msra.mxu0 0.0
    %1533 = vmatprep.subr.mxu0 0.0
    %1534 = vmatpush2.msra.mxu0 0.0
    %1535 = vmatprep.subr.mxu0 0.0
    %1536 = vmatpush2.msra.mxu0 0.0
    %1537 = vmatprep.subr.mxu0 0.0
    %1538 = vmatpush2.msra.mxu0 0.0
    %1539 = vmatprep.subr.mxu0 0.0
    %1540 = vmatpush2.msra.mxu0 0.0
    %1541 = vmatprep.subr.mxu0 0.0
    %1542 = vmatpush2.msra.mxu0 0.0
    %1543 = vmatprep.mubr.f32.mxu0 0.0
    %1544 = vmatmul.mubr.f32.gmra.mxu0 %v1201
    %v1545 = vpop.f32.mrf.mxu0
    %v1546 = vadd.f32 %v1183, %v1545
    %v1547 = vpop.f32.mrf.mxu0
    %v1548 = vadd.f32 %v1183, %v1547
    %1549 = vmatprep.mubr.f32.mxu0 0.0
    %1550 = vmatmul.mubr.f32.gmra.mxu0 %v1204
    %v1551 = vpop.f32.mrf.mxu0
    %v1552 = vadd.f32 %v1188, %v1551
    %v1553 = vpop.f32.mrf.mxu0
    %v1554 = vadd.f32 %v1188, %v1553
    %1555 = vmatprep.mubr.f32.mxu0 0.0
    %1556 = vmatmul.mubr.f32.gmra.mxu0 %v1207
    %v1557 = vpop.f32.mrf.mxu0
    %v1558 = vadd.f32 %v1193, %v1557
    %v1559 = vpop.f32.mrf.mxu0
    %v1560 = vadd.f32 %v1193, %v1559
    %1561 = vmatprep.mubr.f32.mxu0 0.0
    %1562 = vmatmul.mubr.f32.gmra.mxu0 %v1210
    %v1563 = vpop.f32.mrf.mxu0
    %v1564 = vadd.f32 %v1198, %v1563
    %v1565 = vpop.f32.mrf.mxu0
    %v1566 = vadd.f32 %v1198, %v1565
    %1567 = vdwg.mxu0
    %1568 = vmatprep.subr.mxu0 0.0
    %1569 = vmatpush1.msra.mxu0 0.0
    %1570 = vmatprep.subr.mxu0 0.0
    %1571 = vmatpush1.msra.mxu0 0.0
    %1572 = vmatprep.subr.mxu0 0.0
    %1573 = vmatpush1.msra.mxu0 0.0
    %1574 = vmatprep.subr.mxu0 0.0
    %1575 = vmatpush1.msra.mxu0 0.0
    %1576 = vmatprep.subr.mxu0 0.0
    %1577 = vmatpush1.msra.mxu0 0.0
    %1578 = vmatprep.subr.mxu0 0.0
    %1579 = vmatpush1.msra.mxu0 0.0
    %1580 = vmatprep.subr.mxu0 0.0
    %1581 = vmatpush1.msra.mxu0 0.0
    %1582 = vmatprep.subr.mxu0 0.0
    %1583 = vmatpush1.msra.mxu0 0.0
    %1584 = vmatprep.subr.mxu0 0.0
    %1585 = vmatpush1.msra.mxu0 0.0
    %1586 = vmatprep.subr.mxu0 0.0
    %1587 = vmatpush1.msra.mxu0 0.0
    %1588 = vmatprep.subr.mxu0 0.0
    %1589 = vmatpush1.msra.mxu0 0.0
    %1590 = vmatprep.subr.mxu0 0.0
    %1591 = vmatpush1.msra.mxu0 0.0
    %1592 = vmatprep.subr.mxu0 %v1163
    %1593 = vmatpush1.msra.mxu0 %v1162
    %1594 = vmatprep.subr.mxu0 %v1147
    %1595 = vmatpush1.msra.mxu0 %v1146
    %1596 = vmatprep.subr.mxu0 %v1131
    %1597 = vmatpush1.msra.mxu0 %v1130
    %1598 = vmatprep.subr.mxu0 %v1115
    %1599 = vmatpush1.msra.mxu0 %v1114
    %1600 = vmatprep.subr.mxu0 0.0
    %1601 = vmatpush2.msra.mxu0 0.0
    %1602 = vmatprep.subr.mxu0 0.0
    %1603 = vmatpush2.msra.mxu0 0.0
    %1604 = vmatprep.subr.mxu0 0.0
    %1605 = vmatpush2.msra.mxu0 0.0
    %1606 = vmatprep.subr.mxu0 0.0
    %1607 = vmatpush2.msra.mxu0 0.0
    %1608 = vmatprep.subr.mxu0 0.0
    %1609 = vmatpush2.msra.mxu0 0.0
    %1610 = vmatprep.subr.mxu0 0.0
    %1611 = vmatpush2.msra.mxu0 0.0
    %1612 = vmatprep.subr.mxu0 0.0
    %1613 = vmatpush2.msra.mxu0 0.0
    %1614 = vmatprep.subr.mxu0 0.0
    %1615 = vmatpush2.msra.mxu0 0.0
    %1616 = vmatprep.subr.mxu0 0.0
    %1617 = vmatpush2.msra.mxu0 0.0
    %1618 = vmatprep.subr.mxu0 0.0
    %1619 = vmatpush2.msra.mxu0 0.0
    %1620 = vmatprep.subr.mxu0 0.0
    %1621 = vmatpush2.msra.mxu0 0.0
    %1622 = vmatprep.subr.mxu0 0.0
    %1623 = vmatpush2.msra.mxu0 0.0
    %1624 = vmatprep.subr.mxu0 0.0
    %1625 = vmatpush2.msra.mxu0 0.0
    %1626 = vmatprep.subr.mxu0 0.0
    %1627 = vmatpush2.msra.mxu0 0.0
    %1628 = vmatprep.subr.mxu0 0.0
    %1629 = vmatpush2.msra.mxu0 0.0
    %1630 = vmatprep.subr.mxu0 0.0
    %1631 = vmatpush2.msra.mxu0 0.0
    %1632 = vmatprep.mubr.f32.mxu0 0.0
    %1633 = vmatmul.mubr.f32.gmra.mxu0 %v1201
    %v1634 = vpop.f32.mrf.mxu0
    %v1635 = vadd.f32 %v1183, %v1634
    %v1636 = vpop.f32.mrf.mxu0
    %v1637 = vadd.f32 %v1183, %v1636
    %1638 = vmatprep.mubr.f32.mxu0 0.0
    %1639 = vmatmul.mubr.f32.gmra.mxu0 %v1204
    %v1640 = vpop.f32.mrf.mxu0
    %v1641 = vadd.f32 %v1188, %v1640
    %v1642 = vpop.f32.mrf.mxu0
    %v1643 = vadd.f32 %v1188, %v1642
    %1644 = vmatprep.mubr.f32.mxu0 0.0
    %1645 = vmatmul.mubr.f32.gmra.mxu0 %v1207
    %v1646 = vpop.f32.mrf.mxu0
    %v1647 = vadd.f32 %v1193, %v1646
    %v1648 = vpop.f32.mrf.mxu0
    %v1649 = vadd.f32 %v1193, %v1648
    %1650 = vmatprep.mubr.f32.mxu0 0.0
    %1651 = vmatmul.mubr.f32.gmra.mxu0 %v1210
    %v1652 = vpop.f32.mrf.mxu0
    %v1653 = vadd.f32 %v1198, %v1652
    %v1654 = vpop.f32.mrf.mxu0
    %v1655 = vadd.f32 %v1198, %v1654
    %1656 = vdwg.mxu0
    %1657 = vmatprep.subr.mxu0 0.0
    %1658 = vmatpush1.msra.mxu0 0.0
    %1659 = vmatprep.subr.mxu0 0.0
    %1660 = vmatpush1.msra.mxu0 0.0
    %1661 = vmatprep.subr.mxu0 0.0
    %1662 = vmatpush1.msra.mxu0 0.0
    %1663 = vmatprep.subr.mxu0 0.0
    %1664 = vmatpush1.msra.mxu0 0.0
    %1665 = vmatprep.subr.mxu0 0.0
    %1666 = vmatpush1.msra.mxu0 0.0
    %1667 = vmatprep.subr.mxu0 0.0
    %1668 = vmatpush1.msra.mxu0 0.0
    %1669 = vmatprep.subr.mxu0 0.0
    %1670 = vmatpush1.msra.mxu0 0.0
    %1671 = vmatprep.subr.mxu0 0.0
    %1672 = vmatpush1.msra.mxu0 0.0
    %1673 = vmatprep.subr.mxu0 0.0
    %1674 = vmatpush1.msra.mxu0 0.0
    %1675 = vmatprep.subr.mxu0 0.0
    %1676 = vmatpush1.msra.mxu0 0.0
    %1677 = vmatprep.subr.mxu0 0.0
    %1678 = vmatpush1.msra.mxu0 0.0
    %1679 = vmatprep.subr.mxu0 0.0
    %1680 = vmatpush1.msra.mxu0 0.0
    %1681 = vmatprep.subr.mxu0 %v1165
    %1682 = vmatpush1.msra.mxu0 %v1164
    %1683 = vmatprep.subr.mxu0 %v1149
    %1684 = vmatpush1.msra.mxu0 %v1148
    %1685 = vmatprep.subr.mxu0 %v1133
    %1686 = vmatpush1.msra.mxu0 %v1132
    %1687 = vmatprep.subr.mxu0 %v1117
    %1688 = vmatpush1.msra.mxu0 %v1116
    %1689 = vmatprep.subr.mxu0 0.0
    %1690 = vmatpush2.msra.mxu0 0.0
    %1691 = vmatprep.subr.mxu0 0.0
    %1692 = vmatpush2.msra.mxu0 0.0
    %1693 = vmatprep.subr.mxu0 0.0
    %1694 = vmatpush2.msra.mxu0 0.0
    %1695 = vmatprep.subr.mxu0 0.0
    %1696 = vmatpush2.msra.mxu0 0.0
    %1697 = vmatprep.subr.mxu0 0.0
    %1698 = vmatpush2.msra.mxu0 0.0
    %1699 = vmatprep.subr.mxu0 0.0
    %1700 = vmatpush2.msra.mxu0 0.0
    %1701 = vmatprep.subr.mxu0 0.0
    %1702 = vmatpush2.msra.mxu0 0.0
    %1703 = vmatprep.subr.mxu0 0.0
    %1704 = vmatpush2.msra.mxu0 0.0
    %1705 = vmatprep.subr.mxu0 0.0
    %1706 = vmatpush2.msra.mxu0 0.0
    %1707 = vmatprep.subr.mxu0 0.0
    %1708 = vmatpush2.msra.mxu0 0.0
    %1709 = vmatprep.subr.mxu0 0.0
    %1710 = vmatpush2.msra.mxu0 0.0
    %1711 = vmatprep.subr.mxu0 0.0
    %1712 = vmatpush2.msra.mxu0 0.0
    %1713 = vmatprep.subr.mxu0 0.0
    %1714 = vmatpush2.msra.mxu0 0.0
    %1715 = vmatprep.subr.mxu0 0.0
    %1716 = vmatpush2.msra.mxu0 0.0
    %1717 = vmatprep.subr.mxu0 0.0
    %1718 = vmatpush2.msra.mxu0 0.0
    %1719 = vmatprep.subr.mxu0 0.0
    %1720 = vmatpush2.msra.mxu0 0.0
    %1721 = vmatprep.mubr.f32.mxu0 0.0
    %1722 = vmatmul.mubr.f32.gmra.mxu0 %v1201
    %v1723 = vpop.f32.mrf.mxu0
    %v1724 = vadd.f32 %v1183, %v1723
    %v1725 = vpop.f32.mrf.mxu0
    %v1726 = vadd.f32 %v1183, %v1725
    %1727 = vmatprep.mubr.f32.mxu0 0.0
    %1728 = vmatmul.mubr.f32.gmra.mxu0 %v1204
    %v1729 = vpop.f32.mrf.mxu0
    %v1730 = vadd.f32 %v1188, %v1729
    %v1731 = vpop.f32.mrf.mxu0
    %v1732 = vadd.f32 %v1188, %v1731
    %1733 = vmatprep.mubr.f32.mxu0 0.0
    %1734 = vmatmul.mubr.f32.gmra.mxu0 %v1207
    %v1735 = vpop.f32.mrf.mxu0
    %v1736 = vadd.f32 %v1193, %v1735
    %v1737 = vpop.f32.mrf.mxu0
    %v1738 = vadd.f32 %v1193, %v1737
    %1739 = vmatprep.mubr.f32.mxu0 0.0
    %1740 = vmatmul.mubr.f32.gmra.mxu0 %v1210
    %v1741 = vpop.f32.mrf.mxu0
    %v1742 = vadd.f32 %v1198, %v1741
    %v1743 = vpop.f32.mrf.mxu0
    %v1744 = vadd.f32 %v1198, %v1743
    %1745 = vdwg.mxu0
    %1746 = vmatprep.subr.mxu0 0.0
    %1747 = vmatpush1.msra.mxu0 0.0
    %1748 = vmatprep.subr.mxu0 0.0
    %1749 = vmatpush1.msra.mxu0 0.0
    %1750 = vmatprep.subr.mxu0 0.0
    %1751 = vmatpush1.msra.mxu0 0.0
    %1752 = vmatprep.subr.mxu0 0.0
    %1753 = vmatpush1.msra.mxu0 0.0
    %1754 = vmatprep.subr.mxu0 0.0
    %1755 = vmatpush1.msra.mxu0 0.0
    %1756 = vmatprep.subr.mxu0 0.0
    %1757 = vmatpush1.msra.mxu0 0.0
    %1758 = vmatprep.subr.mxu0 0.0
    %1759 = vmatpush1.msra.mxu0 0.0
    %1760 = vmatprep.subr.mxu0 0.0
    %1761 = vmatpush1.msra.mxu0 0.0
    %1762 = vmatprep.subr.mxu0 0.0
    %1763 = vmatpush1.msra.mxu0 0.0
    %1764 = vmatprep.subr.mxu0 0.0
    %1765 = vmatpush1.msra.mxu0 0.0
    %1766 = vmatprep.subr.mxu0 0.0
    %1767 = vmatpush1.msra.mxu0 0.0
    %1768 = vmatprep.subr.mxu0 0.0
    %1769 = vmatpush1.msra.mxu0 0.0
    %1770 = vmatprep.subr.mxu0 %v1167
    %1771 = vmatpush1.msra.mxu0 %v1166
    %1772 = vmatprep.subr.mxu0 %v1151
    %1773 = vmatpush1.msra.mxu0 %v1150
    %1774 = vmatprep.subr.mxu0 %v1135
    %1775 = vmatpush1.msra.mxu0 %v1134
    %1776 = vmatprep.subr.mxu0 %v1119
    %1777 = vmatpush1.msra.mxu0 %v1118
    %1778 = vmatprep.subr.mxu0 0.0
    %1779 = vmatpush2.msra.mxu0 0.0
    %1780 = vmatprep.subr.mxu0 0.0
    %1781 = vmatpush2.msra.mxu0 0.0
    %1782 = vmatprep.subr.mxu0 0.0
    %1783 = vmatpush2.msra.mxu0 0.0
    %1784 = vmatprep.subr.mxu0 0.0
    %1785 = vmatpush2.msra.mxu0 0.0
    %1786 = vmatprep.subr.mxu0 0.0
    %1787 = vmatpush2.msra.mxu0 0.0
    %1788 = vmatprep.subr.mxu0 0.0
    %1789 = vmatpush2.msra.mxu0 0.0
    %1790 = vmatprep.subr.mxu0 0.0
    %1791 = vmatpush2.msra.mxu0 0.0
    %1792 = vmatprep.subr.mxu0 0.0
    %1793 = vmatpush2.msra.mxu0 0.0
    %1794 = vmatprep.subr.mxu0 0.0
    %1795 = vmatpush2.msra.mxu0 0.0
    %1796 = vmatprep.subr.mxu0 0.0
    %1797 = vmatpush2.msra.mxu0 0.0
    %1798 = vmatprep.subr.mxu0 0.0
    %1799 = vmatpush2.msra.mxu0 0.0
    %1800 = vmatprep.subr.mxu0 0.0
    %1801 = vmatpush2.msra.mxu0 0.0
    %1802 = vmatprep.subr.mxu0 0.0
    %1803 = vmatpush2.msra.mxu0 0.0
    %1804 = vmatprep.subr.mxu0 0.0
    %1805 = vmatpush2.msra.mxu0 0.0
    %1806 = vmatprep.subr.mxu0 0.0
    %1807 = vmatpush2.msra.mxu0 0.0
    %1808 = vmatprep.subr.mxu0 0.0
    %1809 = vmatpush2.msra.mxu0 0.0
    %1810 = vmatprep.mubr.f32.mxu0 0.0
    %1811 = vmatmul.mubr.f32.gmra.mxu0 %v1201
    %v1812 = vpop.f32.mrf.mxu0
    %v1813 = vadd.f32 %v1183, %v1812
    %v1814 = vpop.f32.mrf.mxu0
    %v1815 = vadd.f32 %v1183, %v1814
    %1816 = vmatprep.mubr.f32.mxu0 0.0
    %1817 = vmatmul.mubr.f32.gmra.mxu0 %v1204
    %v1818 = vpop.f32.mrf.mxu0
    %v1819 = vadd.f32 %v1188, %v1818
    %v1820 = vpop.f32.mrf.mxu0
    %v1821 = vadd.f32 %v1188, %v1820
    %1822 = vmatprep.mubr.f32.mxu0 0.0
    %1823 = vmatmul.mubr.f32.gmra.mxu0 %v1207
    %v1824 = vpop.f32.mrf.mxu0
    %v1825 = vadd.f32 %v1193, %v1824
    %v1826 = vpop.f32.mrf.mxu0
    %v1827 = vadd.f32 %v1193, %v1826
    %1828 = vmatprep.mubr.f32.mxu0 0.0
    %1829 = vmatmul.mubr.f32.gmra.mxu0 %v1210
    %v1830 = vpop.f32.mrf.mxu0
    %v1831 = vadd.f32 %v1198, %v1830
    %v1832 = vpop.f32.mrf.mxu0
    %v1833 = vadd.f32 %v1198, %v1832
    %1834 = vdwg.mxu0
    %1835 = vmatprep.subr.mxu0 0.0
    %1836 = vmatpush1.msra.mxu0 0.0
    %1837 = vmatprep.subr.mxu0 0.0
    %1838 = vmatpush1.msra.mxu0 0.0
    %1839 = vmatprep.subr.mxu0 0.0
    %1840 = vmatpush1.msra.mxu0 0.0
    %1841 = vmatprep.subr.mxu0 0.0
    %1842 = vmatpush1.msra.mxu0 0.0
    %1843 = vmatprep.subr.mxu0 0.0
    %1844 = vmatpush1.msra.mxu0 0.0
    %1845 = vmatprep.subr.mxu0 0.0
    %1846 = vmatpush1.msra.mxu0 0.0
    %1847 = vmatprep.subr.mxu0 0.0
    %1848 = vmatpush1.msra.mxu0 0.0
    %1849 = vmatprep.subr.mxu0 0.0
    %1850 = vmatpush1.msra.mxu0 0.0
    %1851 = vmatprep.subr.mxu0 0.0
    %1852 = vmatpush1.msra.mxu0 0.0
    %1853 = vmatprep.subr.mxu0 0.0
    %1854 = vmatpush1.msra.mxu0 0.0
    %1855 = vmatprep.subr.mxu0 0.0
    %1856 = vmatpush1.msra.mxu0 0.0
    %1857 = vmatprep.subr.mxu0 0.0
    %1858 = vmatpush1.msra.mxu0 0.0
    %1859 = vmatprep.subr.mxu0 %v1169
    %1860 = vmatpush1.msra.mxu0 %v1168
    %1861 = vmatprep.subr.mxu0 %v1153
    %1862 = vmatpush1.msra.mxu0 %v1152
    %1863 = vmatprep.subr.mxu0 %v1137
    %1864 = vmatpush1.msra.mxu0 %v1136
    %1865 = vmatprep.subr.mxu0 %v1121
    %1866 = vmatpush1.msra.mxu0 %v1120
    %1867 = vmatprep.subr.mxu0 0.0
    %1868 = vmatpush2.msra.mxu0 0.0
    %1869 = vmatprep.subr.mxu0 0.0
    %1870 = vmatpush2.msra.mxu0 0.0
    %1871 = vmatprep.subr.mxu0 0.0
    %1872 = vmatpush2.msra.mxu0 0.0
    %1873 = vmatprep.subr.mxu0 0.0
    %1874 = vmatpush2.msra.mxu0 0.0
    %1875 = vmatprep.subr.mxu0 0.0
    %1876 = vmatpush2.msra.mxu0 0.0
    %1877 = vmatprep.subr.mxu0 0.0
    %1878 = vmatpush2.msra.mxu0 0.0
    %1879 = vmatprep.subr.mxu0 0.0
    %1880 = vmatpush2.msra.mxu0 0.0
    %1881 = vmatprep.subr.mxu0 0.0
    %1882 = vmatpush2.msra.mxu0 0.0
    %1883 = vmatprep.subr.mxu0 0.0
    %1884 = vmatpush2.msra.mxu0 0.0
    %1885 = vmatprep.subr.mxu0 0.0
    %1886 = vmatpush2.msra.mxu0 0.0
    %1887 = vmatprep.subr.mxu0 0.0
    %1888 = vmatpush2.msra.mxu0 0.0
    %1889 = vmatprep.subr.mxu0 0.0
    %1890 = vmatpush2.msra.mxu0 0.0
    %1891 = vmatprep.subr.mxu0 0.0
    %1892 = vmatpush2.msra.mxu0 0.0
    %1893 = vmatprep.subr.mxu0 0.0
    %1894 = vmatpush2.msra.mxu0 0.0
    %1895 = vmatprep.subr.mxu0 0.0
    %1896 = vmatpush2.msra.mxu0 0.0
    %1897 = vmatprep.subr.mxu0 0.0
    %1898 = vmatpush2.msra.mxu0 0.0
    %1899 = vmatprep.mubr.f32.mxu0 0.0
    %1900 = vmatmul.mubr.f32.gmra.mxu0 %v1201
    %v1901 = vpop.f32.mrf.mxu0
    %v1902 = vadd.f32 %v1183, %v1901
    %v1903 = vpop.f32.mrf.mxu0
    %v1904 = vadd.f32 %v1183, %v1903
    %1905 = vmatprep.mubr.f32.mxu0 0.0
    %1906 = vmatmul.mubr.f32.gmra.mxu0 %v1204
    %v1907 = vpop.f32.mrf.mxu0
    %v1908 = vadd.f32 %v1188, %v1907
    %v1909 = vpop.f32.mrf.mxu0
    %v1910 = vadd.f32 %v1188, %v1909
    %1911 = vmatprep.mubr.f32.mxu0 0.0
    %1912 = vmatmul.mubr.f32.gmra.mxu0 %v1207
    %v1913 = vpop.f32.mrf.mxu0
    %v1914 = vadd.f32 %v1193, %v1913
    %v1915 = vpop.f32.mrf.mxu0
    %v1916 = vadd.f32 %v1193, %v1915
    %1917 = vmatprep.mubr.f32.mxu0 0.0
    %1918 = vmatmul.mubr.f32.gmra.mxu0 %v1210
    %v1919 = vpop.f32.mrf.mxu0
    %v1920 = vadd.f32 %v1198, %v1919
    %v1921 = vpop.f32.mrf.mxu0
    %v1922 = vadd.f32 %v1198, %v1921
    %1923 = vdwg.mxu0
    %v1924 = vmax.f32 %v1279, 0.0
    %v1925 = vmax.f32 %v1281, 0.0
    %v1926 = vmax.f32 %v1368, 0.0
    %v1927 = vmax.f32 %v1370, 0.0
    %v1928 = vmax.f32 %v1457, 0.0
    %v1929 = vmax.f32 %v1459, 0.0
    %v1930 = vmax.f32 %v1546, 0.0
    %v1931 = vmax.f32 %v1548, 0.0
    %v1932 = vmax.f32 %v1635, 0.0
    %v1933 = vmax.f32 %v1637, 0.0
    %v1934 = vmax.f32 %v1724, 0.0
    %v1935 = vmax.f32 %v1726, 0.0
    %v1936 = vmax.f32 %v1813, 0.0
    %v1937 = vmax.f32 %v1815, 0.0
    %v1938 = vmax.f32 %v1902, 0.0
    %v1939 = vmax.f32 %v1904, 0.0
    %v1940 = vmax.f32 %v1285, 0.0
    %v1941 = vmax.f32 %v1287, 0.0
    %v1942 = vmax.f32 %v1374, 0.0
    %v1943 = vmax.f32 %v1376, 0.0
    %v1944 = vmax.f32 %v1463, 0.0
    %v1945 = vmax.f32 %v1465, 0.0
    %v1946 = vmax.f32 %v1552, 0.0
    %v1947 = vmax.f32 %v1554, 0.0
    %v1948 = vmax.f32 %v1641, 0.0
    %v1949 = vmax.f32 %v1643, 0.0
    %v1950 = vmax.f32 %v1730, 0.0
    %v1951 = vmax.f32 %v1732, 0.0
    %v1952 = vmax.f32 %v1819, 0.0
    %v1953 = vmax.f32 %v1821, 0.0
    %v1954 = vmax.f32 %v1908, 0.0
    %v1955 = vmax.f32 %v1910, 0.0
    %v1956 = vmax.f32 %v1291, 0.0
    %v1957 = vmax.f32 %v1293, 0.0
    %v1958 = vmax.f32 %v1380, 0.0
    %v1959 = vmax.f32 %v1382, 0.0
    %v1960 = vmax.f32 %v1469, 0.0
    %v1961 = vmax.f32 %v1471, 0.0
    %v1962 = vmax.f32 %v1558, 0.0
    %v1963 = vmax.f32 %v1560, 0.0
    %v1964 = vmax.f32 %v1647, 0.0
    %v1965 = vmax.f32 %v1649, 0.0
    %v1966 = vmax.f32 %v1736, 0.0
    %v1967 = vmax.f32 %v1738, 0.0
    %v1968 = vmax.f32 %v1825, 0.0
    %v1969 = vmax.f32 %v1827, 0.0
    %v1970 = vmax.f32 %v1914, 0.0
    %v1971 = vmax.f32 %v1916, 0.0
    %v1972 = vmax.f32 %v1297, 0.0
    %v1973 = vmax.f32 %v1299, 0.0
    %v1974 = vmax.f32 %v1386, 0.0
    %v1975 = vmax.f32 %v1388, 0.0
    %v1976 = vmax.f32 %v1475, 0.0
    %v1977 = vmax.f32 %v1477, 0.0
    %v1978 = vmax.f32 %v1564, 0.0
    %v1979 = vmax.f32 %v1566, 0.0
    %v1980 = vmax.f32 %v1653, 0.0
    %v1981 = vmax.f32 %v1655, 0.0
    %v1982 = vmax.f32 %v1742, 0.0
    %v1983 = vmax.f32 %v1744, 0.0
    %v1984 = vmax.f32 %v1831, 0.0
    %v1985 = vmax.f32 %v1833, 0.0
    %v1986 = vmax.f32 %v1920, 0.0
    %v1987 = vmax.f32 %v1922, 0.0
    %v1988 = vld [vmem:[%s5] sm:$0xff]
    %v1989 = vld [vmem:[%s5 + $0x8] sm:$0xff]
    %v1990 = vld [vmem:[%s5 + $0x10] sm:$0xff]
    %v1991 = vld [vmem:[%s5 + $0x18] sm:$0xff]
    %1993 = vset.pattern.permute.xlu0 0
    %1994 = vperm.xlu0 %1993, %v1988
    %v1995 = vpop.permute.xlu0 %1994
    %1998 = vset.pattern.permute.xlu0 0
    %1999 = vperm.xlu0 %1998, %v1989
    %v2000 = vpop.permute.xlu0 %1999
    %2003 = vset.pattern.permute.xlu0 0
    %2004 = vperm.xlu0 %2003, %v1990
    %v2005 = vpop.permute.xlu0 %2004
    %2008 = vset.pattern.permute.xlu0 0
    %2009 = vperm.xlu0 %2008, %v1991
    %v2010 = vpop.permute.xlu0 %2009
    %v2012 = vmul.f32 %v1995, %v1924
    %v2013 = vmul.f32 %v1995, %v1925
    %v2014 = vmul.f32 %v1995, %v1926
    %v2015 = vmul.f32 %v1995, %v1927
    %v2016 = vmul.f32 %v1995, %v1928
    %v2017 = vmul.f32 %v1995, %v1929
    %v2018 = vmul.f32 %v1995, %v1930
    %v2019 = vmul.f32 %v1995, %v1931
    %v2020 = vmul.f32 %v1995, %v1932
    %v2021 = vmul.f32 %v1995, %v1933
    %v2022 = vmul.f32 %v1995, %v1934
    %v2023 = vmul.f32 %v1995, %v1935
    %v2024 = vmul.f32 %v1995, %v1936
    %v2025 = vmul.f32 %v1995, %v1937
    %v2026 = vmul.f32 %v1995, %v1938
    %v2027 = vmul.f32 %v1995, %v1939
    %v2028 = vmul.f32 %v2000, %v1940
    %v2029 = vmul.f32 %v2000, %v1941
    %v2030 = vmul.f32 %v2000, %v1942
    %v2031 = vmul.f32 %v2000, %v1943
    %v2032 = vmul.f32 %v2000, %v1944
    %v2033 = vmul.f32 %v2000, %v1945
    %v2034 = vmul.f32 %v2000, %v1946
    %v2035 = vmul.f32 %v2000, %v1947
    %v2036 = vmul.f32 %v2000, %v1948
    %v2037 = vmul.f32 %v2000, %v1949
    %v2038 = vmul.f32 %v2000, %v1950
    %v2039 = vmul.f32 %v2000, %v1951
    %v2040 = vmul.f32 %v2000, %v1952
    %v2041 = vmul.f32 %v2000, %v1953
    %v2042 = vmul.f32 %v2000, %v1954
    %v2043 = vmul.f32 %v2000, %v1955
    %v2044 = vmul.f32 %v2005, %v1956
    %v2045 = vmul.f32 %v2005, %v1957
    %v2046 = vmul.f32 %v2005, %v1958
    %v2047 = vmul.f32 %v2005, %v1959
    %v2048 = vmul.f32 %v2005, %v1960
    %v2049 = vmul.f32 %v2005, %v1961
    %v2050 = vmul.f32 %v2005, %v1962
    %v2051 = vmul.f32 %v2005, %v1963
    %v2052 = vmul.f32 %v2005, %v1964
    %v2053 = vmul.f32 %v2005, %v1965
    %v2054 = vmul.f32 %v2005, %v1966
    %v2055 = vmul.f32 %v2005, %v1967
    %v2056 = vmul.f32 %v2005, %v1968
    %v2057 = vmul.f32 %v2005, %v1969
    %v2058 = vmul.f32 %v2005, %v1970
    %v2059 = vmul.f32 %v2005, %v1971
    %v2060 = vmul.f32 %v2010, %v1972
    %v2061 = vmul.f32 %v2010, %v1973
    %v2062 = vmul.f32 %v2010, %v1974
    %v2063 = vmul.f32 %v2010, %v1975
    %v2064 = vmul.f32 %v2010, %v1976
    %v2065 = vmul.f32 %v2010, %v1977
    %v2066 = vmul.f32 %v2010, %v1978
    %v2067 = vmul.f32 %v2010, %v1979
    %v2068 = vmul.f32 %v2010, %v1980
    %v2069 = vmul.f32 %v2010, %v1981
    %v2070 = vmul.f32 %v2010, %v1982
    %v2071 = vmul.f32 %v2010, %v1983
    %v2072 = vmul.f32 %v2010, %v1984
    %v2073 = vmul.f32 %v2010, %v1985
    %v2074 = vmul.f32 %v2010, %v1986
    %v2075 = vmul.f32 %v2010, %v1987
    %v2076 = vadd.f32 %v2012, %v2028
    %v2077 = vadd.f32 %v2076, %v2044
    %v2078 = vadd.f32 %v2077, %v2060
    %v2079 = vrot.slane %v2078, 4
    %v2080 = vadd.f32 %v2078, %v2079
    %v2081 = vrot.slane %v2080, 2
    %v2082 = vadd.f32 %v2080, %v2081
    %v2083 = vrot.slane %v2082, 1
    %v2084 = vadd.f32 %v2082, %v2083
    %v2085 = vadd.f32 %v2013, %v2029
    %v2086 = vadd.f32 %v2085, %v2045
    %v2087 = vadd.f32 %v2086, %v2061
    %v2088 = vrot.slane %v2087, 4
    %v2089 = vadd.f32 %v2087, %v2088
    %v2090 = vrot.slane %v2089, 2
    %v2091 = vadd.f32 %v2089, %v2090
    %v2092 = vrot.slane %v2091, 1
    %v2093 = vadd.f32 %v2091, %v2092
    %v2094 = vadd.f32 %v2014, %v2030
    %v2095 = vadd.f32 %v2094, %v2046
    %v2096 = vadd.f32 %v2095, %v2062
    %v2097 = vrot.slane %v2096, 4
    %v2098 = vadd.f32 %v2096, %v2097
    %v2099 = vrot.slane %v2098, 2
    %v2100 = vadd.f32 %v2098, %v2099
    %v2101 = vrot.slane %v2100, 1
    %v2102 = vadd.f32 %v2100, %v2101
    %v2103 = vadd.f32 %v2015, %v2031
    %v2104 = vadd.f32 %v2103, %v2047
    %v2105 = vadd.f32 %v2104, %v2063
    %v2106 = vrot.slane %v2105, 4
    %v2107 = vadd.f32 %v2105, %v2106
    %v2108 = vrot.slane %v2107, 2
    %v2109 = vadd.f32 %v2107, %v2108
    %v2110 = vrot.slane %v2109, 1
    %v2111 = vadd.f32 %v2109, %v2110
    %v2112 = vadd.f32 %v2016, %v2032
    %v2113 = vadd.f32 %v2112, %v2048
    %v2114 = vadd.f32 %v2113, %v2064
    %v2115 = vrot.slane %v2114, 4
    %v2116 = vadd.f32 %v2114, %v2115
    %v2117 = vrot.slane %v2116, 2
    %v2118 = vadd.f32 %v2116, %v2117
    %v2119 = vrot.slane %v2118, 1
    %v2120 = vadd.f32 %v2118, %v2119
    %v2121 = vadd.f32 %v2017, %v2033
    %v2122 = vadd.f32 %v2121, %v2049
    %v2123 = vadd.f32 %v2122, %v2065
    %v2124 = vrot.slane %v2123, 4
    %v2125 = vadd.f32 %v2123, %v2124
    %v2126 = vrot.slane %v2125, 2
    %v2127 = vadd.f32 %v2125, %v2126
    %v2128 = vrot.slane %v2127, 1
    %v2129 = vadd.f32 %v2127, %v2128
    %v2130 = vadd.f32 %v2018, %v2034
    %v2131 = vadd.f32 %v2130, %v2050
    %v2132 = vadd.f32 %v2131, %v2066
    %v2133 = vrot.slane %v2132, 4
    %v2134 = vadd.f32 %v2132, %v2133
    %v2135 = vrot.slane %v2134, 2
    %v2136 = vadd.f32 %v2134, %v2135
    %v2137 = vrot.slane %v2136, 1
    %v2138 = vadd.f32 %v2136, %v2137
    %v2139 = vadd.f32 %v2019, %v2035
    %v2140 = vadd.f32 %v2139, %v2051
    %v2141 = vadd.f32 %v2140, %v2067
    %v2142 = vrot.slane %v2141, 4
    %v2143 = vadd.f32 %v2141, %v2142
    %v2144 = vrot.slane %v2143, 2
    %v2145 = vadd.f32 %v2143, %v2144
    %v2146 = vrot.slane %v2145, 1
    %v2147 = vadd.f32 %v2145, %v2146
    %v2148 = vadd.f32 %v2020, %v2036
    %v2149 = vadd.f32 %v2148, %v2052
    %v2150 = vadd.f32 %v2149, %v2068
    %v2151 = vrot.slane %v2150, 4
    %v2152 = vadd.f32 %v2150, %v2151
    %v2153 = vrot.slane %v2152, 2
    %v2154 = vadd.f32 %v2152, %v2153
    %v2155 = vrot.slane %v2154, 1
    %v2156 = vadd.f32 %v2154, %v2155
    %v2157 = vadd.f32 %v2021, %v2037
    %v2158 = vadd.f32 %v2157, %v2053
    %v2159 = vadd.f32 %v2158, %v2069
    %v2160 = vrot.slane %v2159, 4
    %v2161 = vadd.f32 %v2159, %v2160
    %v2162 = vrot.slane %v2161, 2
    %v2163 = vadd.f32 %v2161, %v2162
    %v2164 = vrot.slane %v2163, 1
    %v2165 = vadd.f32 %v2163, %v2164
    %v2166 = vadd.f32 %v2022, %v2038
    %v2167 = vadd.f32 %v2166, %v2054
    %v2168 = vadd.f32 %v2167, %v2070
    %v2169 = vrot.slane %v2168, 4
    %v2170 = vadd.f32 %v2168, %v2169
    %v2171 = vrot.slane %v2170, 2
    %v2172 = vadd.f32 %v2170, %v2171
    %v2173 = vrot.slane %v2172, 1
    %v2174 = vadd.f32 %v2172, %v2173
    %v2175 = vadd.f32 %v2023, %v2039
    %v2176 = vadd.f32 %v2175, %v2055
    %v2177 = vadd.f32 %v2176, %v2071
    %v2178 = vrot.slane %v2177, 4
    %v2179 = vadd.f32 %v2177, %v2178
    %v2180 = vrot.slane %v2179, 2
    %v2181 = vadd.f32 %v2179, %v2180
    %v2182 = vrot.slane %v2181, 1
    %v2183 = vadd.f32 %v2181, %v2182
    %v2184 = vadd.f32 %v2024, %v2040
    %v2185 = vadd.f32 %v2184, %v2056
    %v2186 = vadd.f32 %v2185, %v2072
    %v2187 = vrot.slane %v2186, 4
    %v2188 = vadd.f32 %v2186, %v2187
    %v2189 = vrot.slane %v2188, 2
    %v2190 = vadd.f32 %v2188, %v2189
    %v2191 = vrot.slane %v2190, 1
    %v2192 = vadd.f32 %v2190, %v2191
    %v2193 = vadd.f32 %v2025, %v2041
    %v2194 = vadd.f32 %v2193, %v2057
    %v2195 = vadd.f32 %v2194, %v2073
    %v2196 = vrot.slane %v2195, 4
    %v2197 = vadd.f32 %v2195, %v2196
    %v2198 = vrot.slane %v2197, 2
    %v2199 = vadd.f32 %v2197, %v2198
    %v2200 = vrot.slane %v2199, 1
    %v2201 = vadd.f32 %v2199, %v2200
    %v2202 = vadd.f32 %v2026, %v2042
    %v2203 = vadd.f32 %v2202, %v2058
    %v2204 = vadd.f32 %v2203, %v2074
    %v2205 = vrot.slane %v2204, 4
    %v2206 = vadd.f32 %v2204, %v2205
    %v2207 = vrot.slane %v2206, 2
    %v2208 = vadd.f32 %v2206, %v2207
    %v2209 = vrot.slane %v2208, 1
    %v2210 = vadd.f32 %v2208, %v2209
    %v2211 = vadd.f32 %v2027, %v2043
    %v2212 = vadd.f32 %v2211, %v2059
    %v2213 = vadd.f32 %v2212, %v2075
    %v2214 = vrot.slane %v2213, 4
    %v2215 = vadd.f32 %v2213, %v2214
    %v2216 = vrot.slane %v2215, 2
    %v2217 = vadd.f32 %v2215, %v2216
    %v2218 = vrot.slane %v2217, 1
    %v2219 = vadd.f32 %v2217, %v2218
    %v2220 = vld [vmem:[#allocation2] sm:$0x1]
    %2222 = vset.pattern.permute.xlu0 0
    %2223 = vperm.xlu0 %2222, %v2220
    %v2224 = vpop.permute.xlu0 %2223
    %v2226 = vlaneseq
    %v2227 = vshrl.u32 %v2226, 7
    %v2228 = vsub.s32 0, %v2227
    %v2229 = vrot.slane %v2224, %v2228
    %v2230 = vadd.f32 %v2084, %v2229
    %v2231 = vadd.f32 %v2093, %v2229
    %v2232 = vadd.f32 %v2102, %v2229
    %v2233 = vadd.f32 %v2111, %v2229
    %v2234 = vadd.f32 %v2120, %v2229
    %v2235 = vadd.f32 %v2129, %v2229
    %v2236 = vadd.f32 %v2138, %v2229
    %v2237 = vadd.f32 %v2147, %v2229
    %v2238 = vadd.f32 %v2156, %v2229
    %v2239 = vadd.f32 %v2165, %v2229
    %v2240 = vadd.f32 %v2174, %v2229
    %v2241 = vadd.f32 %v2183, %v2229
    %v2242 = vadd.f32 %v2192, %v2229
    %v2243 = vadd.f32 %v2201, %v2229
    %v2244 = vadd.f32 %v2210, %v2229
    %v2245 = vadd.f32 %v2219, %v2229
    %v2262 = vcombine.low %v2230, %v2231
    %v2263 = vcombine.low %v2232, %v2233
    %v2264 = vcombine.low %v2234, %v2235
    %v2265 = vcombine.low %v2236, %v2237
    %v2267 = vunpack.c.l.s4 1966171168
    %v2268 = vunpack.c.0.s8 %v2267
    %v2269 = vlaneseq
    %v2270 = vshrl.u32 %v2269, 7
    %v2271 = vsub.s32 %v2268, %v2270
    %v2272 = vrot.slane %v2262, %v2271
    %v2274 = vunpack.c.l.s4 1966171168
    %v2275 = vunpack.c.0.s8 %v2274
    %v2276 = vlaneseq
    %v2277 = vshrl.u32 %v2276, 7
    %v2278 = vsub.s32 %v2275, %v2277
    %v2279 = vrot.slane %v2263, %v2278
    %v2281 = vunpack.c.l.s4 1966171168
    %v2282 = vunpack.c.0.s8 %v2281
    %v2283 = vlaneseq
    %v2284 = vshrl.u32 %v2283, 7
    %v2285 = vsub.s32 %v2282, %v2284
    %v2286 = vrot.slane %v2264, %v2285
    %v2288 = vunpack.c.l.s4 1966171168
    %v2289 = vunpack.c.0.s8 %v2288
    %v2290 = vlaneseq
    %v2291 = vshrl.u32 %v2290, 7
    %v2292 = vsub.s32 %v2289, %v2291
    %v2293 = vrot.slane %v2265, %v2292
    %v2294 = vcombine.low %v2272, %v2279
    %v2295 = vcombine.low %v2286, %v2293
    %v2297 = vunpack.c.l.s4 1966171168
    %v2298 = vunpack.c.0.s8 %v2297
    %v2299 = vlaneseq
    %v2300 = vshrl.u32 %v2299, 7
    %v2301 = vsub.s32 %v2298, %v2300
    %v2302 = vrot.slane %v2294, %v2301
    %v2304 = vunpack.c.l.s4 1966171168
    %v2305 = vunpack.c.0.s8 %v2304
    %v2306 = vlaneseq
    %v2307 = vshrl.u32 %v2306, 7
    %v2308 = vsub.s32 %v2305, %v2307
    %v2309 = vrot.slane %v2295, %v2308
    %v2310 = vcombine.low %v2302, %v2309
    %v2311 = vcombine.low %v2238, %v2239
    %v2312 = vcombine.low %v2240, %v2241
    %v2313 = vcombine.low %v2242, %v2243
    %v2314 = vcombine.low %v2244, %v2245
    %v2316 = vunpack.c.l.s4 1966171168
    %v2317 = vunpack.c.0.s8 %v2316
    %v2318 = vlaneseq
    %v2319 = vshrl.u32 %v2318, 7
    %v2320 = vsub.s32 %v2317, %v2319
    %v2321 = vrot.slane %v2311, %v2320
    %v2323 = vunpack.c.l.s4 1966171168
    %v2324 = vunpack.c.0.s8 %v2323
    %v2325 = vlaneseq
    %v2326 = vshrl.u32 %v2325, 7
    %v2327 = vsub.s32 %v2324, %v2326
    %v2328 = vrot.slane %v2312, %v2327
    %v2330 = vunpack.c.l.s4 1966171168
    %v2331 = vunpack.c.0.s8 %v2330
    %v2332 = vlaneseq
    %v2333 = vshrl.u32 %v2332, 7
    %v2334 = vsub.s32 %v2331, %v2333
    %v2335 = vrot.slane %v2313, %v2334
    %v2337 = vunpack.c.l.s4 1966171168
    %v2338 = vunpack.c.0.s8 %v2337
    %v2339 = vlaneseq
    %v2340 = vshrl.u32 %v2339, 7
    %v2341 = vsub.s32 %v2338, %v2340
    %v2342 = vrot.slane %v2314, %v2341
    %v2343 = vcombine.low %v2321, %v2328
    %v2344 = vcombine.low %v2335, %v2342
    %v2346 = vunpack.c.l.s4 1966171168
    %v2347 = vunpack.c.0.s8 %v2346
    %v2348 = vlaneseq
    %v2349 = vshrl.u32 %v2348, 7
    %v2350 = vsub.s32 %v2347, %v2349
    %v2351 = vrot.slane %v2343, %v2350
    %v2353 = vunpack.c.l.s4 1966171168
    %v2354 = vunpack.c.0.s8 %v2353
    %v2355 = vlaneseq
    %v2356 = vshrl.u32 %v2355, 7
    %v2357 = vsub.s32 %v2354, %v2356
    %v2358 = vrot.slane %v2344, %v2357
    %v2359 = vcombine.low %v2351, %v2358
    %2362 = vst [vmem:[#allocation3] sm:$0xff] %v2310
    %2363 = vst [vmem:[#allocation3 + $0x8] sm:$0xff] %v2359
    // Predicated region
    $region30: #{_gen_phase_forward.1} parent=1 // pred_check
      _
    $region31: #{_gen_phase_forward.1} parent=1 // pred_check_branch
      %2365 = sbr.rel (0) target = $region33
    $region32: #{_gen_phase_forward.1} parent=1 // pred_region
      %s2367 = ssub.s32 256, 256
      %2368 = vsyncadd [#allocation4], %s2367
      %s2370 = sshll.u32 [#allocation3], 4
      %s2371 = int_to_ptr.vmem [resolvable:$true] %s2370
      %2373 = dma.vmem_to_hbm [thread:$0]  %s2371, 256, %s7, [#allocation4]
    $region33: #{_gen_phase_forward.1} parent=1 // pred_fallthru
      _
    // Predicated region
    $region34: #{_gen_phase_forward.1} parent=1 // pred_check
      _
    $region35: #{_gen_phase_forward.1} parent=1 // pred_check_branch
      %2375 = sbr.rel (0) target = $region37
    $region36: #{_gen_phase_forward.1} parent=1 // pred_region
      %2376 = dma.done [#allocation4], 256
    $region37: #{_gen_phase_forward.1} parent=1 // pred_fallthru
      _
    %2377 = vsyncpa [#allocation4], 1

</llo_original>
